<compile_context>
chip_gen: v6e
topology: v6e:2x2x1
jax: 0.10.0
libtpu: 0.0.40
codegen_flags: <defaults>
</compile_context>

<pallas_src>
import jax
import jax.numpy as jnp
from jax.experimental import pallas as pl
from jax.experimental.pallas import tpu as pltpu


# ----------------------------- Pallas kernel --------------------------------
def _shift_left_lanes(x, k):
    """out[:, q] = x[:, q + k]; the last k columns are filled with zeros.

    The zero-filled columns only ever land on padded (junk) output columns
    that the wrapper discards, so the fill value is irrelevant."""
    if k == 0:
        return x
    zeros = jnp.zeros((x.shape[0], k), x.dtype)
    return jnp.concatenate([x[:, k:], zeros], axis=1)


def backbone_kernel(x_ref, w1_ref, b1_ref, w2_ref, b2_ref, out_ref):
    # x_ref : (3*C_in, TM) bf16 -- rows are the 3 ky-shifted views of the
    #         conv-padded image (ky-major, channel-minor); lanes are the
    #         flattened (row, padded-col) positions of this row tile.
    # w1_ref: (3, C1, 3*C_in) bf16 -- one (C1, 3*C_in) tap matrix per kx shift.
    x = x_ref[...]

    # conv1 (3x3, pad 1): 3 accumulated MXU matmuls, one per kx tap.  The ky
    # taps are already stacked on the channel axis; the kx taps are produced
    # in-kernel by shifting the lane axis (in-kernel im2col, no HBM blow-up).
    acc = jnp.dot(w1_ref[0], x, preferred_element_type=jnp.float32)
    acc = acc + jnp.dot(w1_ref[1], _shift_left_lanes(x, 1),
                        preferred_element_type=jnp.float32)
    acc = acc + jnp.dot(w1_ref[2], _shift_left_lanes(x, 2),
                        preferred_element_type=jnp.float32)

    h = jnp.maximum(acc + b1_ref[...], 0.0)              # f32 bias + ReLU epilogue

    # conv2 (1x1): bf16 MXU inputs, f32 accumulation, f32 bias.
    o = jnp.dot(w2_ref[...], h.astype(jnp.bfloat16),
                preferred_element_type=jnp.float32) + b2_ref[...]
    out_ref[...] = o.astype(out_ref.dtype)


def fused_backbone(x_in, w1, b1, w2, b2, tile_lanes):
    """x_in: (3*C_in, M) bf16 with M = Hp*Wp (flattened padded image on lanes).
    Returns the (C2, M) float32 feature map."""
    k3, m = x_in.shape
    _, c1, _ = w1.shape
    c2 = w2.shape[0]
    assert m % tile_lanes == 0 and tile_lanes % 128 == 0
    n_tiles = m // tile_lanes

    flops = 2 * m * (3 * c1 * k3 + c2 * c1)
    bytes_accessed = (x_in.size * 2 + m * c2 * 4
                      + w1.size * 2 + w2.size * 2 + b1.size * 4 + b2.size * 4)

    return pl.pallas_call(
        backbone_kernel,
        out_shape=jax.ShapeDtypeStruct((c2, m), jnp.float32),
        grid=(n_tiles,),
        in_specs=[
            pl.BlockSpec((k3, tile_lanes), lambda i: (0, i)),   # streamed input
            pl.BlockSpec((3, c1, k3), lambda i: (0, 0, 0)),     # resident weights
            pl.BlockSpec((c1, 1), lambda i: (0, 0)),
            pl.BlockSpec((c2, c1), lambda i: (0, 0)),
            pl.BlockSpec((c2, 1), lambda i: (0, 0)),
        ],
        out_specs=pl.BlockSpec((c2, tile_lanes), lambda i: (0, i)),
        compiler_params=pltpu.CompilerParams(
            dimension_semantics=("parallel",)),                 # 2 TCs on v7x
        cost_estimate=pl.CostEstimate(flops=flops, transcendentals=0,
                                      bytes_accessed=bytes_accessed),
    )(x_in, w1, b1, w2, b2)


# ------------------------------- glue (JAX) ---------------------------------
def _prepare_input(img, tile_rows):
    """img: (C, H, W) f32 -> (3*C, Hp*Wp) bf16, plus (Hp, Wp).

    Pads H/W by 1 for the 3x3 conv, pads the width up to a multiple of 128
    (dense lanes, room for the in-kernel kx shifts) and H up to a multiple of
    tile_rows (no ragged last tile), then stacks the 3 row-shifted (ky) views
    on the channel axis and flattens (row, col) onto the lane axis."""
    c, h, w = img.shape
    wp = ((w + 2 + 127) // 128) * 128
    hp = ((h + tile_rows - 1) // tile_rows) * tile_rows
    xp = jnp.pad(img, ((0, 0), (1, 1 + hp - h), (1, wp - w - 1)))   # (C, Hp+2, Wp)
    views = [xp[:, ky:ky + hp, :] for ky in range(3)]               # 3 x (C, Hp, Wp)
    x_in = jnp.concatenate(views, axis=0).reshape(3 * c, hp * wp)
    return x_in.astype(jnp.bfloat16), hp, wp


def _flatten_to_tuple(outputs):
    """Mirror of detectron2's _flatten_to_tuple for JAX arrays / lists / dicts."""
    result = []
    if isinstance(outputs, jnp.ndarray):
        result.append(outputs)
    elif isinstance(outputs, (list, tuple)):
        for v in outputs:
            result.extend(_flatten_to_tuple(v))
    elif isinstance(outputs, dict):
        for _, v in outputs.items():
            result.extend(_flatten_to_tuple(v))
    # TODO(synk): Instances / Boxes / BitMasks / ImageList containers have no
    # JAX equivalent here; only tensor / list / dict outputs are flattened.
    return tuple(result)


class WrapModelPallas:
    """Stand-in for WrapModel(build_model(cfg)) with a tiny deterministic backbone."""

    def __init__(self, c_in=3, c1=16, c2=8, tile_rows=128, key=None):
        if key is None:
            key = jax.random.PRNGKey(0)
        k1, k2, k3, k4 = jax.random.split(key, 4)
        # PyTorch conv weight layouts (kept in f32 for the reference path).
        self.w1_torch = jax.random.normal(k1, (c1, c_in, 3, 3), jnp.float32) * 0.1
        self.w2_torch = jax.random.normal(k3, (c2, c1, 1, 1), jnp.float32) * 0.1
        self.b1 = (jax.random.normal(k2, (c1,), jnp.float32) * 0.1).reshape(c1, 1)
        self.b2 = (jax.random.normal(k4, (c2,), jnp.float32) * 0.1).reshape(c2, 1)
        # Kernel layouts: w1[kx, o, ky*C + c] = w1_torch[o, c, ky, kx]   (bf16)
        #                 w2[o2, o]           = w2_torch[o2, o, 0, 0]    (bf16)
        self.w1 = jnp.transpose(self.w1_torch, (3, 0, 2, 1)).reshape(
            3, c1, 3 * c_in).astype(jnp.bfloat16)
        self.w2 = self.w2_torch.reshape(c2, c1).astype(jnp.bfloat16)
        self.c_in, self.c1, self.c2 = c_in, c1, c2
        self.tile_rows = tile_rows

    def _model_forward(self, inputs):
        # detectron2-style: list of {'image': CHW tensor}; here batch size 1.
        img = inputs[0]["image"].astype(jnp.float32)     # (C, H, W)
        c, h, w = img.shape
        assert c == self.c_in
        tr = max(1, min(self.tile_rows, h))              # rows per grid step
        x_in, hp, wp = _prepare_input(img, tr)
        feat_flat = fused_backbone(x_in, self.w1, self.b1, self.w2, self.b2,
                                   tile_lanes=tr * wp)   # (C2, Hp*Wp)
        feat = feat_flat.reshape(self.c2, hp, wp)[:, :h, :w][None]  # (1, C2, H, W)
        return {"p2": feat}                              # dict-of-features output

    def forward(self, image):
        inputs = [{"image": image}]
        outputs = self._model_forward(inputs)
        return _flatten_to_tuple(outputs)


# --------------------------- pure-JAX reference ------------------------------
def _reference_forward(img, w1_torch, b1, w2_torch, b2):
    """Reference mirroring the kernel numerics (bf16 matmul inputs, f32 accum)."""
    f32 = jnp.float32
    xb = img.astype(jnp.bfloat16).astype(f32)[None]
    w1b = w1_torch.astype(jnp.bfloat16).astype(f32)
    w2b = w2_torch.astype(jnp.bfloat16).astype(f32)
    dn = ("NCHW", "OIHW", "NCHW")
    h = jax.lax.conv_general_dilated(xb, w1b, (1, 1), ((1, 1), (1, 1)),
                                     dimension_numbers=dn,
                                     precision=jax.lax.Precision.HIGHEST)
    h = jnp.maximum(h + b1.reshape(1, -1, 1, 1), 0.0)
    hb = h.astype(jnp.bfloat16).astype(f32)
    o = jax.lax.conv_general_dilated(hb, w2b, (1, 1), ((0, 0), (0, 0)),
                                     dimension_numbers=dn,
                                     precision=jax.lax.Precision.HIGHEST)
    return o + b2.reshape(1, -1, 1, 1)


if __name__ == "__main__":
    key = jax.random.PRNGKey(0)
    k_img, k_model = jax.random.split(key)
    c, h, w = 3, 56, 40                     # small; H not a multiple of the tile
    image = jax.random.normal(k_img, (c, h, w), jnp.float32)   # CHW, as detectron2

    # tile_rows=16 -> Hp=64, Wp=128, 4 grid steps of lane-dense (8, 2048) tiles.
    wrapped = WrapModelPallas(c_in=c, c1=16, c2=8, tile_rows=16, key=k_model)
    out = wrapped.forward(image)
    assert isinstance(out, tuple) and len(out) == 1
    feat = jax.block_until_ready(out[0])
    assert feat.shape == (1, 8, h, w)

    ref = _reference_forward(image, wrapped.w1_torch, wrapped.b1,
                             wrapped.w2_torch, wrapped.b2)
    err = float(jnp.max(jnp.abs(feat - ref)))
    assert err < 2e-2, f"kernel/reference mismatch: max abs err = {err}"
    print("KERNEL_OK")
</pallas_src>

<mosaic_0001>
module attributes {stable_mosaic.version = 11 : i64} {
  func.func @backbone_kernel(%arg0: i32, %arg1: memref<9x2048xbf16, #tpu.memory_space<vmem>>, %arg2: memref<3x16x9xbf16, #tpu.memory_space<vmem>>, %arg3: memref<16x1xf32, #tpu.memory_space<vmem>>, %arg4: memref<8x16xbf16, #tpu.memory_space<vmem>>, %arg5: memref<8x1xf32, #tpu.memory_space<vmem>>, %arg6: memref<8x2048xf32, #tpu.memory_space<vmem>>) attributes {dimension_semantics = [#tpu.dimension_semantics<parallel>], iteration_bounds = array<i64: 4>, scalar_prefetch = 0 : i64, scratch_operands = 0 : i64, tpu.core_type = #tpu.core_type<tc>, window_params = [{transform_indices = @transform_0, window_bounds = array<i64: 9, 2048>}, {pipeline_mode = #tpu.pipeline_mode<synchronous>, transform_indices = @transform_1, window_bounds = array<i64: 3, 16, 9>}, {pipeline_mode = #tpu.pipeline_mode<synchronous>, transform_indices = @transform_2, window_bounds = array<i64: 16, 1>}, {pipeline_mode = #tpu.pipeline_mode<synchronous>, transform_indices = @transform_3, window_bounds = array<i64: 8, 16>}, {pipeline_mode = #tpu.pipeline_mode<synchronous>, transform_indices = @transform_4, window_bounds = array<i64: 8, 1>}, {transform_indices = @transform_5, window_bounds = array<i64: 8, 2048>}]} {
    %c0 = arith.constant 0 : index
    %c0_0 = arith.constant 0 : index
    %0 = vector.load %arg1[%c0, %c0_0] : memref<9x2048xbf16, #tpu.memory_space<vmem>>, vector<9x2048xbf16>
    %c0_1 = arith.constant 0 : index
    %c0_2 = arith.constant 0 : index
    %c0_3 = arith.constant 0 : index
    %1 = vector.load %arg2[%c0_1, %c0_2, %c0_3] : memref<3x16x9xbf16, #tpu.memory_space<vmem>>, vector<1x16x9xbf16>
    %2 = vector.shape_cast %1 : vector<1x16x9xbf16> to vector<16x9xbf16>
    %cst = arith.constant dense<0.000000e+00> : vector<16x2048xf32>
    %3 = tpu.matmul %2, %0, %cst {dimension_numbers = #tpu.dot_dimension_numbers<[1], [0], [0], [1], [0, 0, 1, 1], [], []>} : vector<16x9xbf16>, vector<9x2048xbf16>, vector<16x2048xf32> -> vector<16x2048xf32>
    %c1 = arith.constant 1 : index
    %c0_4 = arith.constant 0 : index
    %c0_5 = arith.constant 0 : index
    %4 = vector.load %arg2[%c1, %c0_4, %c0_5] : memref<3x16x9xbf16, #tpu.memory_space<vmem>>, vector<1x16x9xbf16>
    %5 = vector.shape_cast %4 : vector<1x16x9xbf16> to vector<16x9xbf16>
    %cst_6 = arith.constant 0.000000e+00 : bf16
    %6 = vector.broadcast %cst_6 : bf16 to vector<9x1xbf16>
    %7 = vector.extract_strided_slice %0 {offsets = [0, 1], sizes = [9, 2047], strides = [1, 1]} : vector<9x2048xbf16> to vector<9x2047xbf16>
    %8 = tpu.concatenate %7, %6 in 1 : vector<9x2047xbf16>, vector<9x1xbf16> -> vector<9x2048xbf16>
    %cst_7 = arith.constant dense<0.000000e+00> : vector<16x2048xf32>
    %9 = tpu.matmul %5, %8, %cst_7 {dimension_numbers = #tpu.dot_dimension_numbers<[1], [0], [0], [1], [0, 0, 1, 1], [], []>} : vector<16x9xbf16>, vector<9x2048xbf16>, vector<16x2048xf32> -> vector<16x2048xf32>
    %10 = arith.addf %3, %9 : vector<16x2048xf32>
    %c2 = arith.constant 2 : index
    %c0_8 = arith.constant 0 : index
    %c0_9 = arith.constant 0 : index
    %11 = vector.load %arg2[%c2, %c0_8, %c0_9] : memref<3x16x9xbf16, #tpu.memory_space<vmem>>, vector<1x16x9xbf16>
    %12 = vector.shape_cast %11 : vector<1x16x9xbf16> to vector<16x9xbf16>
    %cst_10 = arith.constant 0.000000e+00 : bf16
    %13 = vector.broadcast %cst_10 : bf16 to vector<9x2xbf16>
    %14 = vector.extract_strided_slice %0 {offsets = [0, 2], sizes = [9, 2046], strides = [1, 1]} : vector<9x2048xbf16> to vector<9x2046xbf16>
    %15 = tpu.concatenate %14, %13 in 1 : vector<9x2046xbf16>, vector<9x2xbf16> -> vector<9x2048xbf16>
    %cst_11 = arith.constant dense<0.000000e+00> : vector<16x2048xf32>
    %16 = tpu.matmul %12, %15, %cst_11 {dimension_numbers = #tpu.dot_dimension_numbers<[1], [0], [0], [1], [0, 0, 1, 1], [], []>} : vector<16x9xbf16>, vector<9x2048xbf16>, vector<16x2048xf32> -> vector<16x2048xf32>
    %17 = arith.addf %10, %16 : vector<16x2048xf32>
    %c0_12 = arith.constant 0 : index
    %c0_13 = arith.constant 0 : index
    %18 = vector.load %arg3[%c0_12, %c0_13] : memref<16x1xf32, #tpu.memory_space<vmem>>, vector<16x1xf32>
    %19 = vector.broadcast %18 : vector<16x1xf32> to vector<16x2048xf32>
    %20 = arith.addf %17, %19 : vector<16x2048xf32>
    %cst_14 = arith.constant 0.000000e+00 : f32
    %21 = vector.broadcast %cst_14 : f32 to vector<16x2048xf32>
    %22 = arith.maximumf %20, %21 : vector<16x2048xf32>
    %c0_15 = arith.constant 0 : index
    %c0_16 = arith.constant 0 : index
    %23 = vector.load %arg4[%c0_15, %c0_16] : memref<8x16xbf16, #tpu.memory_space<vmem>>, vector<8x16xbf16>
    %24 = arith.truncf %22 : vector<16x2048xf32> to vector<16x2048xbf16>
    %cst_17 = arith.constant dense<0.000000e+00> : vector<8x2048xf32>
    %25 = tpu.matmul %23, %24, %cst_17 {dimension_numbers = #tpu.dot_dimension_numbers<[1], [0], [0], [1], [0, 0, 1, 1], [], []>} : vector<8x16xbf16>, vector<16x2048xbf16>, vector<8x2048xf32> -> vector<8x2048xf32>
    %c0_18 = arith.constant 0 : index
    %c0_19 = arith.constant 0 : index
    %26 = vector.load %arg5[%c0_18, %c0_19] : memref<8x1xf32, #tpu.memory_space<vmem>>, vector<8x1xf32>
    %27 = vector.broadcast %26 : vector<8x1xf32> to vector<8x2048xf32>
    %28 = arith.addf %25, %27 : vector<8x2048xf32>
    %c0_20 = arith.constant 0 : index
    %c0_21 = arith.constant 0 : index
    %29 = vector.load %arg6[%c0_20, %c0_21] : memref<8x2048xf32, #tpu.memory_space<vmem>>, vector<8x2048xf32>
    tpu.vector_store %arg6[%c0_20, %c0_21], %28 {strides = array<i32>} : memref<8x2048xf32, #tpu.memory_space<vmem>>, vector<8x2048xf32>,
    return
  }
  func.func @transform_0(%arg0: i32) -> (i32, i32) {
    %c0_i32 = arith.constant 0 : i32
    %c0_i32_0 = arith.constant 0 : i32
    return %c0_i32, %arg0 : i32, i32
  }
  func.func @transform_1(%arg0: i32) -> (i32, i32, i32) {
    %c0_i32 = arith.constant 0 : i32
    %c0_i32_0 = arith.constant 0 : i32
    %c0_i32_1 = arith.constant 0 : i32
    %c0_i32_2 = arith.constant 0 : i32
    return %c0_i32, %c0_i32_0, %c0_i32_1 : i32, i32, i32
  }
  func.func @transform_2(%arg0: i32) -> (i32, i32) {
    %c0_i32 = arith.constant 0 : i32
    %c0_i32_0 = arith.constant 0 : i32
    %c0_i32_1 = arith.constant 0 : i32
    return %c0_i32, %c0_i32_0 : i32, i32
  }
  func.func @transform_3(%arg0: i32) -> (i32, i32) {
    %c0_i32 = arith.constant 0 : i32
    %c0_i32_0 = arith.constant 0 : i32
    %c0_i32_1 = arith.constant 0 : i32
    return %c0_i32, %c0_i32_0 : i32, i32
  }
  func.func @transform_4(%arg0: i32) -> (i32, i32) {
    %c0_i32 = arith.constant 0 : i32
    %c0_i32_0 = arith.constant 0 : i32
    %c0_i32_1 = arith.constant 0 : i32
    return %c0_i32, %c0_i32_0 : i32, i32
  }
  func.func @transform_5(%arg0: i32) -> (i32, i32) {
    %c0_i32 = arith.constant 0 : i32
    %c0_i32_0 = arith.constant 0 : i32
    return %c0_i32, %arg0 : i32, i32
  }
}

</mosaic_0001>

<llo_original>
// kernel: tpu_custom_call.1
$region0: #{tpu_custom_call.1}
  #allocation0 [shape = 'u32[]', space=smem, size = 0x4, offset = 0x4, fixed_abs, tag = 'smem constant byte address 0x4 - core index']
  #allocation1 [shape = 'u32[144,128]{1,0:T(1,128)}', space=vmem, size = 0x12000, scoped, tag = 'internal scratch']
  %s0 = inlined_call_operand.hbm [shape: bf16[9,8192], index: 0, kind: input, shape index: {}]
  %s1 = inlined_call_operand.vmem [shape: bf16[3,16,9], index: 1, kind: input, shape index: {}]
  %s2 = inlined_call_operand.vmem [shape: f32[16,1], index: 2, kind: input, shape index: {}]
  %s3 = inlined_call_operand.vmem [shape: bf16[8,16], index: 3, kind: input, shape index: {}]
  %s4 = inlined_call_operand.vmem [shape: f32[8,1], index: 4, kind: input, shape index: {}]
  %s5 = inlined_call_operand.hbm [shape: f32[8,8192], index: 5, kind: output, shape index: {}]
  %s6 = sld [smem:[#allocation0]]
  $region57: #{tpu_custom_call.1} parent=0
    _
  %s8 = ssub.s32 1, %s6
  %s9 = scalar_select 0, %s8, %s6
  $region1: #{tpu_custom_call.1} parent=0
    #allocation2 [shape = 'u8[131072]{0}', space=vmem, size = 0x20000, scoped, tag = 'input window, operand 0']
    #allocation3 [shape = 's32[2]{0}', space=sflag, size = 0x8, scoped, tag = 'scoped memory for tpu_custom_call.1']
    #allocation4 [shape = 's32[2]{0}', space=sflag, size = 0x8, scoped, tag = 'scoped memory for tpu_custom_call.1']
    #allocation5 [shape = 'u8[131072]{0}', space=vmem, size = 0x20000, scoped, tag = 'output window, operand 0']
    %10 = vsyncpa [#allocation3], 0
    %s11 = scalar_lea.sflag [#allocation3], 1
    %12 = vsyncpa %s11, 0
    %13 = vsyncpa [#allocation4], 0
    %s14 = scalar_lea.sflag [#allocation4], 1
    %15 = vsyncpa %s14, 0
    loop: start=0, step=1, limit=6
    $region2: #{tpu_custom_call.1} parent=1 // loop_pre_header
      _
    $region3: #{tpu_custom_call.1} parent=1 // loop_header
      %s17 = sphi 0, %s21
      %p18 = scmp.ge.s32.totalorder %s17, 6
      %s27 = sphi 0, %s29
      %s30 = sphi 0, %s27
      %s31 = sphi 0, %s30
      %s47 = sphi 0, %s31
      %s51 = sphi 0, %s51
      %s53 = sphi 0, %s51
      %s54 = sphi 0, %s53
      %s68 = sphi 0, %s54
      %s72 = sphi 0, %s72
      %s74 = sphi 0, %s72
      %s75 = sphi 0, %s74
      %s89 = sphi 0, %s75
      %s93 = sphi 0, %s93
      %s95 = sphi 0, %s93
      %s96 = sphi 0, %s95
      %s110 = sphi 0, %s96
      %s114 = sphi 0, %s114
      %s116 = sphi 0, %s114
      %s117 = sphi 0, %s116
      %s131 = sphi 0, %s117
      %s137 = sphi 0, %s139
      %s140 = sphi 0, %s137
      %s141 = sphi 0, %s140
      %s157 = sphi 0, %s141
    $region4: #{tpu_custom_call.1} parent=1 // loop_header_branch
      %20 = sbr.rel (%p18) target = $region8
    $region5: #{tpu_custom_call.1} parent=1 // loop_body
      %s22 = ssub.s32 %s17, 1
      %s23 = ssub.s32 %s17, 2
      %s24 = sadd.s32 %s17, 1
      %s25 = ssub.s32 %s17, %s24
      %p26 = scmp.eq.s32.totalorder %s25, 0
      %s28 = sadd.s32 %s27, 1
      %s29 = scalar_select %p26, %s27, %s28
      %p32 = pneg %p26
      %p33 = scmp.eq.s32.totalorder %s17, 3
      %p34 = por %p32, %p33
      %p35 = scmp.ne.s32.totalorder %s27, %s30
      %p36 = scmp.eq.s32.totalorder %s17, 0
      %p37 = por %p35, %p36
      %p38 = scmp.ne.s32.totalorder %s27, %s30
      %p39 = scmp.eq.s32.totalorder %s22, 3
      %p40 = por %p38, %p39
      %p41 = scmp.ne.s32.totalorder %s30, %s31
      %p42 = scmp.eq.s32.totalorder %s22, 0
      %p43 = por %p41, %p42
      %p44 = scmp.ne.s32.totalorder %s30, %s31
      %p45 = scmp.eq.s32.totalorder %s23, 3
      %p46 = por %p44, %p45
      %p48 = scmp.ne.s32.totalorder %s31, %s47
      %p49 = scmp.eq.s32.totalorder %s23, 0
      %p50 = por %p48, %p49
      %s52 = sadd.s32 %s51, 1
      %p55 = scmp.eq.s32.totalorder %s17, 3
      %p56 = scmp.ne.s32.totalorder %s51, %s53
      %p57 = scmp.eq.s32.totalorder %s17, 0
      %p58 = por %p56, %p57
      %p59 = scmp.ne.s32.totalorder %s51, %s53
      %p60 = scmp.eq.s32.totalorder %s22, 3
      %p61 = por %p59, %p60
      %p62 = scmp.ne.s32.totalorder %s53, %s54
      %p63 = scmp.eq.s32.totalorder %s22, 0
      %p64 = por %p62, %p63
      %p65 = scmp.ne.s32.totalorder %s53, %s54
      %p66 = scmp.eq.s32.totalorder %s23, 3
      %p67 = por %p65, %p66
      %p69 = scmp.ne.s32.totalorder %s54, %s68
      %p70 = scmp.eq.s32.totalorder %s23, 0
      %p71 = por %p69, %p70
      %s73 = sadd.s32 %s72, 1
      %p76 = scmp.eq.s32.totalorder %s17, 3
      %p77 = scmp.ne.s32.totalorder %s72, %s74
      %p78 = scmp.eq.s32.totalorder %s17, 0
      %p79 = por %p77, %p78
      %p80 = scmp.ne.s32.totalorder %s72, %s74
      %p81 = scmp.eq.s32.totalorder %s22, 3
      %p82 = por %p80, %p81
      %p83 = scmp.ne.s32.totalorder %s74, %s75
      %p84 = scmp.eq.s32.totalorder %s22, 0
      %p85 = por %p83, %p84
      %p86 = scmp.ne.s32.totalorder %s74, %s75
      %p87 = scmp.eq.s32.totalorder %s23, 3
      %p88 = por %p86, %p87
      %p90 = scmp.ne.s32.totalorder %s75, %s89
      %p91 = scmp.eq.s32.totalorder %s23, 0
      %p92 = por %p90, %p91
      %s94 = sadd.s32 %s93, 1
      %p97 = scmp.eq.s32.totalorder %s17, 3
      %p98 = scmp.ne.s32.totalorder %s93, %s95
      %p99 = scmp.eq.s32.totalorder %s17, 0
      %p100 = por %p98, %p99
      %p101 = scmp.ne.s32.totalorder %s93, %s95
      %p102 = scmp.eq.s32.totalorder %s22, 3
      %p103 = por %p101, %p102
      %p104 = scmp.ne.s32.totalorder %s95, %s96
      %p105 = scmp.eq.s32.totalorder %s22, 0
      %p106 = por %p104, %p105
      %p107 = scmp.ne.s32.totalorder %s95, %s96
      %p108 = scmp.eq.s32.totalorder %s23, 3
      %p109 = por %p107, %p108
      %p111 = scmp.ne.s32.totalorder %s96, %s110
      %p112 = scmp.eq.s32.totalorder %s23, 0
      %p113 = por %p111, %p112
      %s115 = sadd.s32 %s114, 1
      %p118 = scmp.eq.s32.totalorder %s17, 3
      %p119 = scmp.ne.s32.totalorder %s114, %s116
      %p120 = scmp.eq.s32.totalorder %s17, 0
      %p121 = por %p119, %p120
      %p122 = scmp.ne.s32.totalorder %s114, %s116
      %p123 = scmp.eq.s32.totalorder %s22, 3
      %p124 = por %p122, %p123
      %p125 = scmp.ne.s32.totalorder %s116, %s117
      %p126 = scmp.eq.s32.totalorder %s22, 0
      %p127 = por %p125, %p126
      %p128 = scmp.ne.s32.totalorder %s116, %s117
      %p129 = scmp.eq.s32.totalorder %s23, 3
      %p130 = por %p128, %p129
      %p132 = scmp.ne.s32.totalorder %s117, %s131
      %p133 = scmp.eq.s32.totalorder %s23, 0
      %p134 = por %p132, %p133
      %s135 = ssub.s32 %s17, %s24
      %p136 = scmp.eq.s32.totalorder %s135, 0
      %s138 = sadd.s32 %s137, 1
      %s139 = scalar_select %p136, %s137, %s138
      %p142 = pneg %p136
      %p143 = scmp.eq.s32.totalorder %s17, 3
      %p144 = por %p142, %p143
      %p145 = scmp.ne.s32.totalorder %s137, %s140
      %p146 = scmp.eq.s32.totalorder %s17, 0
      %p147 = por %p145, %p146
      %p148 = scmp.ne.s32.totalorder %s137, %s140
      %p149 = scmp.eq.s32.totalorder %s22, 3
      %p150 = por %p148, %p149
      %p151 = scmp.ne.s32.totalorder %s140, %s141
      %p152 = scmp.eq.s32.totalorder %s22, 0
      %p153 = por %p151, %p152
      %p154 = scmp.ne.s32.totalorder %s140, %s141
      %p155 = scmp.eq.s32.totalorder %s23, 3
      %p156 = por %p154, %p155
      %p158 = scmp.ne.s32.totalorder %s141, %s157
      %p159 = scmp.eq.s32.totalorder %s23, 0
      %p160 = por %p158, %p159
      %p161 = scmp.le.s32.totalorder 1, %s17
      %p162 = scmp.lt.s32.totalorder %s17, 5
      %p163 = pnand %p161, %p162
      %p164 = pneg %p163
      // Predicated region
      $region9: #{tpu_custom_call.1} parent=5 // pred_check
        _
      $region10: #{tpu_custom_call.1} parent=5 // pred_check_branch
        %166 = sbr.rel (%p163) target = $region12
      $region11: #{tpu_custom_call.1} parent=5 // pred_region
        %s167 = ssub.s32 %s17, 1
        // Predicated region
        $region13: #{tpu_custom_call.1} parent=11 // pred_check
          %p168 = pneg %p64
        $region14: #{tpu_custom_call.1} parent=11 // pred_check_branch
          %170 = sbr.rel (%p168) target = $region16
        $region15: #{tpu_custom_call.1} parent=11 // pred_region
          _
        $region16: #{tpu_custom_call.1} parent=11 // pred_fallthru
          _
        // Predicated region
        $region17: #{tpu_custom_call.1} parent=11 // pred_check
          %p171 = pneg %p85
        $region18: #{tpu_custom_call.1} parent=11 // pred_check_branch
          %173 = sbr.rel (%p171) target = $region20
        $region19: #{tpu_custom_call.1} parent=11 // pred_region
          _
        $region20: #{tpu_custom_call.1} parent=11 // pred_fallthru
          _
        // Predicated region
        $region21: #{tpu_custom_call.1} parent=11 // pred_check
          %p174 = pneg %p106
        $region22: #{tpu_custom_call.1} parent=11 // pred_check_branch
          %176 = sbr.rel (%p174) target = $region24
        $region23: #{tpu_custom_call.1} parent=11 // pred_region
          _
        $region24: #{tpu_custom_call.1} parent=11 // pred_fallthru
          _
        // Predicated region
        $region25: #{tpu_custom_call.1} parent=11 // pred_check
          %p177 = pneg %p127
        $region26: #{tpu_custom_call.1} parent=11 // pred_check_branch
          %179 = sbr.rel (%p177) target = $region28
        $region27: #{tpu_custom_call.1} parent=11 // pred_region
          _
        $region28: #{tpu_custom_call.1} parent=11 // pred_fallthru
          _
      $region12: #{tpu_custom_call.1} parent=5 // pred_fallthru
        _
      %p180 = scmp.lt.s32.totalorder %s17, 4
      // Predicated region
      $region29: #{tpu_custom_call.1} parent=5 // pred_check
        %p181 = pneg %p180
      $region30: #{tpu_custom_call.1} parent=5 // pred_check_branch
        %183 = sbr.rel (%p181) target = $region32
      $region31: #{tpu_custom_call.1} parent=5 // pred_region
        // Predicated region
        $region33: #{tpu_custom_call.1} parent=31 // pred_check
          %p184 = pneg %p37
        $region34: #{tpu_custom_call.1} parent=31 // pred_check_branch
          %186 = sbr.rel (%p184) target = $region36
        $region35: #{tpu_custom_call.1} parent=31 // pred_region
          %s187 = sand.u32 %s27, 1
          %s188 = scalar_lea.sflag [#allocation3], %s187
          %s189 = sand.u32 %s27, 1
          %s190 = smul.addr %s189, 128
          %s191 = scalar_lea.vmem [#allocation2], %s190
          %s192 = smul.u32 16, %s17
          %s194 = ssub.s32 2048, 2048
          %195 = vsyncadd %s188, %s194
          %s196 = smul.addr %s192, 64
          %s197 = scalar_lea.hbm %s0, %s196
          %s198 = sshll.u32 %s191, 4
          %s199 = int_to_ptr.vmem [resolvable:$true] %s198
          %204 = dma.hbm_to_vmem [thread:$0]  %s197, 2048, %s199, %s188, 4096, 1024, 64
        $region36: #{tpu_custom_call.1} parent=31 // pred_fallthru
          _
      $region32: #{tpu_custom_call.1} parent=5 // pred_fallthru
        _
      %p205 = scmp.le.s32.totalorder 1, %s17
      %p206 = scmp.lt.s32.totalorder %s17, 5
      %p207 = pnand %p205, %p206
      %p208 = pneg %p207
      // Predicated region
      $region37: #{tpu_custom_call.1} parent=5 // pred_check
        _
      $region38: #{tpu_custom_call.1} parent=5 // pred_check_branch
        %210 = sbr.rel (%p207) target = $region40
      $region39: #{tpu_custom_call.1} parent=5 // pred_region
        %s211 = ssub.s32 %s17, 1
        %s212 = sand.u32 %s30, 1
        %s213 = scalar_lea.sflag [#allocation3], %s212
        %s214 = sand.u32 %s30, 1
        %s215 = smul.addr %s214, 128
        %s216 = scalar_lea.vmem [#allocation2], %s215
        // Predicated region
        $region41: #{tpu_custom_call.1} parent=39 // pred_check
          %p217 = pneg %p43
        $region42: #{tpu_custom_call.1} parent=39 // pred_check_branch
          %219 = sbr.rel (%p217) target = $region44
        $region43: #{tpu_custom_call.1} parent=39 // pred_region
          %220 = dma.done %s213, 2048
        $region44: #{tpu_custom_call.1} parent=39 // pred_fallthru
          _
        %s221 = sand.u32 %s30, 1
        %s222 = scalar_lea.sflag [#allocation3], %s221
        %s223 = sand.u32 %s30, 1
        %s224 = smul.addr %s223, 128
        %s225 = scalar_lea.vmem [#allocation2], %s224
        %p226 = pneg %p43
        %p227 = pneg %p40
        %p228 = pneg %p64
        %p229 = pneg %p61
        %p230 = pneg %p85
        %p231 = pneg %p82
        %p232 = pneg %p106
        %p233 = pneg %p103
        %p234 = pneg %p127
        %p235 = pneg %p124
        %p236 = pneg %p153
        %p237 = pneg %p150
        %s238 = sand.u32 %s140, 1
        %s239 = scalar_lea.sflag [#allocation4], %s238
        %s240 = sand.u32 %s140, 1
        %s241 = smul.addr %s240, 128
        %s242 = scalar_lea.vmem [#allocation5], %s241
        %s243 = smul.u32 16, %s22
        %s244 = smul.u32 16, %s22
        %v246 = vld [vmem:[%s216] sm:$0xff]
        %v247 = vld [vmem:[%s216 + $0x8] sm:$0xff]
        %v248 = vld [vmem:[%s216 + $0x10] sm:$0xff]
        %v249 = vld [vmem:[%s216 + $0x18] sm:$0xff]
        %v250 = vld [vmem:[%s216 + $0x20] sm:$0xff]
        %v251 = vld [vmem:[%s216 + $0x28] sm:$0xff]
        %v252 = vld [vmem:[%s216 + $0x30] sm:$0xff]
        %v253 = vld [vmem:[%s216 + $0x38] sm:$0xff]
        %v254 = vld [vmem:[%s216 + $0x40] sm:$0x11]
        %v255 = vld [vmem:[%s216 + $0x48] sm:$0x11]
        %v256 = vld [vmem:[%s216 + $0x50] sm:$0x11]
        %v257 = vld [vmem:[%s216 + $0x58] sm:$0x11]
        %v258 = vld [vmem:[%s216 + $0x60] sm:$0x11]
        %v259 = vld [vmem:[%s216 + $0x68] sm:$0x11]
        %v260 = vld [vmem:[%s216 + $0x70] sm:$0x11]
        %v261 = vld [vmem:[%s216 + $0x78] sm:$0x11]
        %v262 = vld [vmem:[%s1] sm:$0xf]
        %v263 = vld [vmem:[%s1 + $0x4] sm:$0xf]
        %s264 = scalar_lea.vmem %s1, 8
        %v265 = vld [vmem:[%s264] sm:$0xf]
        %v266 = vld [vmem:[%s264 + $0x4] sm:$0xf]
        %v283 = vunpack.c.l.b16 %v246
        %v284 = vunpack.c.h.b16 %v246
        %v285 = vunpack.c.l.b16 %v247
        %v286 = vunpack.c.h.b16 %v247
        %v287 = vunpack.c.l.b16 %v248
        %v288 = vunpack.c.h.b16 %v248
        %v289 = vunpack.c.l.b16 %v249
        %v290 = vunpack.c.h.b16 %v249
        %v291 = vunpack.c.l.b16 %v250
        %v292 = vunpack.c.h.b16 %v250
        %v293 = vunpack.c.l.b16 %v251
        %v294 = vunpack.c.h.b16 %v251
        %v295 = vunpack.c.l.b16 %v252
        %v296 = vunpack.c.h.b16 %v252
        %v297 = vunpack.c.l.b16 %v253
        %v298 = vunpack.c.h.b16 %v253
        %v299 = vunpack.c.l.b16 %v254
        %v300 = vunpack.c.h.b16 %v254
        %v301 = vunpack.c.l.b16 %v255
        %v302 = vunpack.c.h.b16 %v255
        %v303 = vunpack.c.l.b16 %v256
        %v304 = vunpack.c.h.b16 %v256
        %v305 = vunpack.c.l.b16 %v257
        %v306 = vunpack.c.h.b16 %v257
        %v307 = vunpack.c.l.b16 %v258
        %v308 = vunpack.c.h.b16 %v258
        %v309 = vunpack.c.l.b16 %v259
        %v310 = vunpack.c.h.b16 %v259
        %v311 = vunpack.c.l.b16 %v260
        %v312 = vunpack.c.h.b16 %v260
        %v313 = vunpack.c.l.b16 %v261
        %v314 = vunpack.c.h.b16 %v261
        %v315 = vpack.c.b16 %v299, %v283
        %v316 = vpack.c.b16 %v300, %v284
        %v317 = vpack.c.b16 %v301, %v285
        %v318 = vpack.c.b16 %v302, %v286
        %v319 = vpack.c.b16 %v303, %v287
        %v320 = vpack.c.b16 %v304, %v288
        %v321 = vpack.c.b16 %v305, %v289
        %v322 = vpack.c.b16 %v306, %v290
        %v323 = vpack.c.b16 %v307, %v291
        %v324 = vpack.c.b16 %v308, %v292
        %v325 = vpack.c.b16 %v309, %v293
        %v326 = vpack.c.b16 %v310, %v294
        %v327 = vpack.c.b16 %v311, %v295
        %v328 = vpack.c.b16 %v312, %v296
        %v329 = vpack.c.b16 %v313, %v297
        %v330 = vpack.c.b16 %v314, %v298
        %331 = vrot.lane.b32.xlu0 %v315, 127
        %v332 = vpop.permute.xlu0 %331
        %333 = vrot.lane.b32.xlu0 %v316, 127
        %v334 = vpop.permute.xlu0 %333
        %335 = vrot.lane.b32.xlu0 %v317, 127
        %v336 = vpop.permute.xlu0 %335
        %337 = vrot.lane.b32.xlu0 %v318, 127
        %v338 = vpop.permute.xlu0 %337
        %339 = vrot.lane.b32.xlu0 %v319, 127
        %v340 = vpop.permute.xlu0 %339
        %341 = vrot.lane.b32.xlu0 %v320, 127
        %v342 = vpop.permute.xlu0 %341
        %343 = vrot.lane.b32.xlu0 %v321, 127
        %v344 = vpop.permute.xlu0 %343
        %345 = vrot.lane.b32.xlu0 %v322, 127
        %v346 = vpop.permute.xlu0 %345
        %347 = vrot.lane.b32.xlu0 %v323, 127
        %v348 = vpop.permute.xlu0 %347
        %349 = vrot.lane.b32.xlu0 %v324, 127
        %v350 = vpop.permute.xlu0 %349
        %351 = vrot.lane.b32.xlu0 %v325, 127
        %v352 = vpop.permute.xlu0 %351
        %353 = vrot.lane.b32.xlu0 %v326, 127
        %v354 = vpop.permute.xlu0 %353
        %355 = vrot.lane.b32.xlu0 %v327, 127
        %v356 = vpop.permute.xlu0 %355
        %357 = vrot.lane.b32.xlu0 %v328, 127
        %v358 = vpop.permute.xlu0 %357
        %359 = vrot.lane.b32.xlu0 %v329, 127
        %v360 = vpop.permute.xlu0 %359
        %361 = vrot.lane.b32.xlu0 %v330, 127
        %v362 = vpop.permute.xlu0 %361
        %vm363 = vcmask 1039360
        %v364 = vsel %vm363, %v332, %v334
        %v365 = vsel %vm363, %v334, %v336
        %v366 = vsel %vm363, %v336, %v338
        %v367 = vsel %vm363, %v338, %v340
        %v368 = vsel %vm363, %v340, %v342
        %v369 = vsel %vm363, %v342, %v344
        %v370 = vsel %vm363, %v344, %v346
        %v371 = vsel %vm363, %v346, %v348
        %v372 = vsel %vm363, %v348, %v350
        %v373 = vsel %vm363, %v350, %v352
        %v374 = vsel %vm363, %v352, %v354
        %v375 = vsel %vm363, %v354, %v356
        %v376 = vsel %vm363, %v356, %v358
        %v377 = vsel %vm363, %v358, %v360
        %v378 = vsel %vm363, %v360, %v362
        %vm379 = vcmask 1039360
        %v382 = vsel %vm379, %v362, 0
        %v385 = vunpack.c.l.b16 %v265
        %v386 = vunpack.c.l.b16 %v266
        %v387 = vpack.c.b16 %v386, %v385
        %vm388 = vcmask 72704
        %v390 = vsel %vm388, %v387, 0
        %vm392 = vcmask 1043456
        %vm393 = vcmask 1044480
        %v394 = vsel %vm392, 4294967295, 65535
        %v395 = vsel %vm393, %v394, 0
        %v397 = vand.u32 %v364, %v395
        %v400 = vand.u32 %v365, %v395
        %v403 = vand.u32 %v366, %v395
        %v406 = vand.u32 %v367, %v395
        %v409 = vand.u32 %v368, %v395
        %v412 = vand.u32 %v369, %v395
        %v415 = vand.u32 %v370, %v395
        %v418 = vand.u32 %v371, %v395
        %v421 = vand.u32 %v372, %v395
        %v424 = vand.u32 %v373, %v395
        %v427 = vand.u32 %v374, %v395
        %v430 = vand.u32 %v375, %v395
        %v433 = vand.u32 %v376, %v395
        %v436 = vand.u32 %v377, %v395
        %v439 = vand.u32 %v378, %v395
        %v441 = vand.u32 %v382, %v395
        %443 = vmatprep.subr.bf16.mxu0 0
        %444 = vmatpush1.bf16.msra.mxu0 0
        %445 = vmatprep.subr.bf16.mxu0 0
        %446 = vmatpush1.bf16.msra.mxu0 0
        %447 = vmatprep.subr.bf16.mxu0 0
        %448 = vmatpush1.bf16.msra.mxu0 0
        %449 = vmatprep.subr.bf16.mxu0 0
        %450 = vmatpush1.bf16.msra.mxu0 0
        %451 = vmatprep.subr.bf16.mxu0 0
        %452 = vmatpush1.bf16.msra.mxu0 0
        %453 = vmatprep.subr.bf16.mxu0 0
        %454 = vmatpush1.bf16.msra.mxu0 0
        %455 = vmatprep.subr.bf16.mxu0 0
        %456 = vmatpush1.bf16.msra.mxu0 0
        %457 = vmatprep.subr.bf16.mxu0 %v400
        %458 = vmatpush1.bf16.msra.mxu0 %v397
        %459 = vmatprep.subr.bf16.mxu0 0
        %460 = vmatpush2.bf16.msra.mxu0 0
        %461 = vmatprep.subr.bf16.mxu0 0
        %462 = vmatpush2.bf16.msra.mxu0 0
        %463 = vmatprep.subr.bf16.mxu0 0
        %464 = vmatpush2.bf16.msra.mxu0 0
        %465 = vmatprep.subr.bf16.mxu0 0
        %466 = vmatpush2.bf16.msra.mxu0 0
        %467 = vmatprep.subr.bf16.mxu0 0
        %468 = vmatpush2.bf16.msra.mxu0 0
        %469 = vmatprep.subr.bf16.mxu0 0
        %470 = vmatpush2.bf16.msra.mxu0 0
        %471 = vmatprep.subr.bf16.mxu0 0
        %472 = vmatpush2.bf16.msra.mxu0 0
        %473 = vmatprep.subr.bf16.mxu0 0
        %474 = vmatpush2.bf16.msra.mxu0 0
        %475 = vmatprep.mubr.bf16.mxu0 0
        %476 = vmatmul.mubr.bf16.gmra.mxu0 %v390
        %v477 = vpop.f32.mrf.mxu0
        %v478 = vadd.f32 0.0, %v477
        %v479 = vpop.f32.mrf.mxu0
        %v480 = vadd.f32 0.0, %v479
        %v481 = vpop.f32.mrf.mxu0
        %v482 = vadd.f32 0.0, %v481
        %v483 = vpop.f32.mrf.mxu0
        %v484 = vadd.f32 0.0, %v483
        %485 = vdwg.mxu0
        %486 = vmatprep.subr.bf16.mxu0 0
        %487 = vmatpush1.bf16.msra.mxu0 0
        %488 = vmatprep.subr.bf16.mxu0 0
        %489 = vmatpush1.bf16.msra.mxu0 0
        %490 = vmatprep.subr.bf16.mxu0 0
        %491 = vmatpush1.bf16.msra.mxu0 0
        %492 = vmatprep.subr.bf16.mxu0 0
        %493 = vmatpush1.bf16.msra.mxu0 0
        %494 = vmatprep.subr.bf16.mxu0 0
        %495 = vmatpush1.bf16.msra.mxu0 0
        %496 = vmatprep.subr.bf16.mxu0 0
        %497 = vmatpush1.bf16.msra.mxu0 0
        %498 = vmatprep.subr.bf16.mxu0 0
        %499 = vmatpush1.bf16.msra.mxu0 0
        %500 = vmatprep.subr.bf16.mxu0 %v406
        %501 = vmatpush1.bf16.msra.mxu0 %v403
        %502 = vmatprep.subr.bf16.mxu0 0
        %503 = vmatpush2.bf16.msra.mxu0 0
        %504 = vmatprep.subr.bf16.mxu0 0
        %505 = vmatpush2.bf16.msra.mxu0 0
        %506 = vmatprep.subr.bf16.mxu0 0
        %507 = vmatpush2.bf16.msra.mxu0 0
        %508 = vmatprep.subr.bf16.mxu0 0
        %509 = vmatpush2.bf16.msra.mxu0 0
        %510 = vmatprep.subr.bf16.mxu0 0
        %511 = vmatpush2.bf16.msra.mxu0 0
        %512 = vmatprep.subr.bf16.mxu0 0
        %513 = vmatpush2.bf16.msra.mxu0 0
        %514 = vmatprep.subr.bf16.mxu0 0
        %515 = vmatpush2.bf16.msra.mxu0 0
        %516 = vmatprep.subr.bf16.mxu0 0
        %517 = vmatpush2.bf16.msra.mxu0 0
        %518 = vmatprep.mubr.bf16.mxu0 0
        %519 = vmatmul.mubr.bf16.gmra.mxu0 %v390
        %v520 = vpop.f32.mrf.mxu0
        %v521 = vadd.f32 0.0, %v520
        %v522 = vpop.f32.mrf.mxu0
        %v523 = vadd.f32 0.0, %v522
        %v524 = vpop.f32.mrf.mxu0
        %v525 = vadd.f32 0.0, %v524
        %v526 = vpop.f32.mrf.mxu0
        %v527 = vadd.f32 0.0, %v526
        %528 = vdwg.mxu0
        %529 = vmatprep.subr.bf16.mxu0 0
        %530 = vmatpush1.bf16.msra.mxu0 0
        %531 = vmatprep.subr.bf16.mxu0 0
        %532 = vmatpush1.bf16.msra.mxu0 0
        %533 = vmatprep.subr.bf16.mxu0 0
        %534 = vmatpush1.bf16.msra.mxu0 0
        %535 = vmatprep.subr.bf16.mxu0 0
        %536 = vmatpush1.bf16.msra.mxu0 0
        %537 = vmatprep.subr.bf16.mxu0 0
        %538 = vmatpush1.bf16.msra.mxu0 0
        %539 = vmatprep.subr.bf16.mxu0 0
        %540 = vmatpush1.bf16.msra.mxu0 0
        %541 = vmatprep.subr.bf16.mxu0 0
        %542 = vmatpush1.bf16.msra.mxu0 0
        %543 = vmatprep.subr.bf16.mxu0 %v412
        %544 = vmatpush1.bf16.msra.mxu0 %v409
        %545 = vmatprep.subr.bf16.mxu0 0
        %546 = vmatpush2.bf16.msra.mxu0 0
        %547 = vmatprep.subr.bf16.mxu0 0
        %548 = vmatpush2.bf16.msra.mxu0 0
        %549 = vmatprep.subr.bf16.mxu0 0
        %550 = vmatpush2.bf16.msra.mxu0 0
        %551 = vmatprep.subr.bf16.mxu0 0
        %552 = vmatpush2.bf16.msra.mxu0 0
        %553 = vmatprep.subr.bf16.mxu0 0
        %554 = vmatpush2.bf16.msra.mxu0 0
        %555 = vmatprep.subr.bf16.mxu0 0
        %556 = vmatpush2.bf16.msra.mxu0 0
        %557 = vmatprep.subr.bf16.mxu0 0
        %558 = vmatpush2.bf16.msra.mxu0 0
        %559 = vmatprep.subr.bf16.mxu0 0
        %560 = vmatpush2.bf16.msra.mxu0 0
        %561 = vmatprep.mubr.bf16.mxu0 0
        %562 = vmatmul.mubr.bf16.gmra.mxu0 %v390
        %v563 = vpop.f32.mrf.mxu0
        %v564 = vadd.f32 0.0, %v563
        %v565 = vpop.f32.mrf.mxu0
        %v566 = vadd.f32 0.0, %v565
        %v567 = vpop.f32.mrf.mxu0
        %v568 = vadd.f32 0.0, %v567
        %v569 = vpop.f32.mrf.mxu0
        %v570 = vadd.f32 0.0, %v569
        %571 = vdwg.mxu0
        %572 = vmatprep.subr.bf16.mxu0 0
        %573 = vmatpush1.bf16.msra.mxu0 0
        %574 = vmatprep.subr.bf16.mxu0 0
        %575 = vmatpush1.bf16.msra.mxu0 0
        %576 = vmatprep.subr.bf16.mxu0 0
        %577 = vmatpush1.bf16.msra.mxu0 0
        %578 = vmatprep.subr.bf16.mxu0 0
        %579 = vmatpush1.bf16.msra.mxu0 0
        %580 = vmatprep.subr.bf16.mxu0 0
        %581 = vmatpush1.bf16.msra.mxu0 0
        %582 = vmatprep.subr.bf16.mxu0 0
        %583 = vmatpush1.bf16.msra.mxu0 0
        %584 = vmatprep.subr.bf16.mxu0 0
        %585 = vmatpush1.bf16.msra.mxu0 0
        %586 = vmatprep.subr.bf16.mxu0 %v418
        %587 = vmatpush1.bf16.msra.mxu0 %v415
        %588 = vmatprep.subr.bf16.mxu0 0
        %589 = vmatpush2.bf16.msra.mxu0 0
        %590 = vmatprep.subr.bf16.mxu0 0
        %591 = vmatpush2.bf16.msra.mxu0 0
        %592 = vmatprep.subr.bf16.mxu0 0
        %593 = vmatpush2.bf16.msra.mxu0 0
        %594 = vmatprep.subr.bf16.mxu0 0
        %595 = vmatpush2.bf16.msra.mxu0 0
        %596 = vmatprep.subr.bf16.mxu0 0
        %597 = vmatpush2.bf16.msra.mxu0 0
        %598 = vmatprep.subr.bf16.mxu0 0
        %599 = vmatpush2.bf16.msra.mxu0 0
        %600 = vmatprep.subr.bf16.mxu0 0
        %601 = vmatpush2.bf16.msra.mxu0 0
        %602 = vmatprep.subr.bf16.mxu0 0
        %603 = vmatpush2.bf16.msra.mxu0 0
        %604 = vmatprep.mubr.bf16.mxu0 0
        %605 = vmatmul.mubr.bf16.gmra.mxu0 %v390
        %v606 = vpop.f32.mrf.mxu0
        %v607 = vadd.f32 0.0, %v606
        %v608 = vpop.f32.mrf.mxu0
        %v609 = vadd.f32 0.0, %v608
        %v610 = vpop.f32.mrf.mxu0
        %v611 = vadd.f32 0.0, %v610
        %v612 = vpop.f32.mrf.mxu0
        %v613 = vadd.f32 0.0, %v612
        %614 = vdwg.mxu0
        %615 = vmatprep.subr.bf16.mxu0 0
        %616 = vmatpush1.bf16.msra.mxu0 0
        %617 = vmatprep.subr.bf16.mxu0 0
        %618 = vmatpush1.bf16.msra.mxu0 0
        %619 = vmatprep.subr.bf16.mxu0 0
        %620 = vmatpush1.bf16.msra.mxu0 0
        %621 = vmatprep.subr.bf16.mxu0 0
        %622 = vmatpush1.bf16.msra.mxu0 0
        %623 = vmatprep.subr.bf16.mxu0 0
        %624 = vmatpush1.bf16.msra.mxu0 0
        %625 = vmatprep.subr.bf16.mxu0 0
        %626 = vmatpush1.bf16.msra.mxu0 0
        %627 = vmatprep.subr.bf16.mxu0 0
        %628 = vmatpush1.bf16.msra.mxu0 0
        %629 = vmatprep.subr.bf16.mxu0 %v424
        %630 = vmatpush1.bf16.msra.mxu0 %v421
        %631 = vmatprep.subr.bf16.mxu0 0
        %632 = vmatpush2.bf16.msra.mxu0 0
        %633 = vmatprep.subr.bf16.mxu0 0
        %634 = vmatpush2.bf16.msra.mxu0 0
        %635 = vmatprep.subr.bf16.mxu0 0
        %636 = vmatpush2.bf16.msra.mxu0 0
        %637 = vmatprep.subr.bf16.mxu0 0
        %638 = vmatpush2.bf16.msra.mxu0 0
        %639 = vmatprep.subr.bf16.mxu0 0
        %640 = vmatpush2.bf16.msra.mxu0 0
        %641 = vmatprep.subr.bf16.mxu0 0
        %642 = vmatpush2.bf16.msra.mxu0 0
        %643 = vmatprep.subr.bf16.mxu0 0
        %644 = vmatpush2.bf16.msra.mxu0 0
        %645 = vmatprep.subr.bf16.mxu0 0
        %646 = vmatpush2.bf16.msra.mxu0 0
        %647 = vmatprep.mubr.bf16.mxu0 0
        %648 = vmatmul.mubr.bf16.gmra.mxu0 %v390
        %v649 = vpop.f32.mrf.mxu0
        %v650 = vadd.f32 0.0, %v649
        %v651 = vpop.f32.mrf.mxu0
        %v652 = vadd.f32 0.0, %v651
        %v653 = vpop.f32.mrf.mxu0
        %v654 = vadd.f32 0.0, %v653
        %v655 = vpop.f32.mrf.mxu0
        %v656 = vadd.f32 0.0, %v655
        %657 = vdwg.mxu0
        %658 = vmatprep.subr.bf16.mxu0 0
        %659 = vmatpush1.bf16.msra.mxu0 0
        %660 = vmatprep.subr.bf16.mxu0 0
        %661 = vmatpush1.bf16.msra.mxu0 0
        %662 = vmatprep.subr.bf16.mxu0 0
        %663 = vmatpush1.bf16.msra.mxu0 0
        %664 = vmatprep.subr.bf16.mxu0 0
        %665 = vmatpush1.bf16.msra.mxu0 0
        %666 = vmatprep.subr.bf16.mxu0 0
        %667 = vmatpush1.bf16.msra.mxu0 0
        %668 = vmatprep.subr.bf16.mxu0 0
        %669 = vmatpush1.bf16.msra.mxu0 0
        %670 = vmatprep.subr.bf16.mxu0 0
        %671 = vmatpush1.bf16.msra.mxu0 0
        %672 = vmatprep.subr.bf16.mxu0 %v430
        %673 = vmatpush1.bf16.msra.mxu0 %v427
        %674 = vmatprep.subr.bf16.mxu0 0
        %675 = vmatpush2.bf16.msra.mxu0 0
        %676 = vmatprep.subr.bf16.mxu0 0
        %677 = vmatpush2.bf16.msra.mxu0 0
        %678 = vmatprep.subr.bf16.mxu0 0
        %679 = vmatpush2.bf16.msra.mxu0 0
        %680 = vmatprep.subr.bf16.mxu0 0
        %681 = vmatpush2.bf16.msra.mxu0 0
        %682 = vmatprep.subr.bf16.mxu0 0
        %683 = vmatpush2.bf16.msra.mxu0 0
        %684 = vmatprep.subr.bf16.mxu0 0
        %685 = vmatpush2.bf16.msra.mxu0 0
        %686 = vmatprep.subr.bf16.mxu0 0
        %687 = vmatpush2.bf16.msra.mxu0 0
        %688 = vmatprep.subr.bf16.mxu0 0
        %689 = vmatpush2.bf16.msra.mxu0 0
        %690 = vmatprep.mubr.bf16.mxu0 0
        %691 = vmatmul.mubr.bf16.gmra.mxu0 %v390
        %v692 = vpop.f32.mrf.mxu0
        %v693 = vadd.f32 0.0, %v692
        %v694 = vpop.f32.mrf.mxu0
        %v695 = vadd.f32 0.0, %v694
        %v696 = vpop.f32.mrf.mxu0
        %v697 = vadd.f32 0.0, %v696
        %v698 = vpop.f32.mrf.mxu0
        %v699 = vadd.f32 0.0, %v698
        %700 = vdwg.mxu0
        %701 = vmatprep.subr.bf16.mxu0 0
        %702 = vmatpush1.bf16.msra.mxu0 0
        %703 = vmatprep.subr.bf16.mxu0 0
        %704 = vmatpush1.bf16.msra.mxu0 0
        %705 = vmatprep.subr.bf16.mxu0 0
        %706 = vmatpush1.bf16.msra.mxu0 0
        %707 = vmatprep.subr.bf16.mxu0 0
        %708 = vmatpush1.bf16.msra.mxu0 0
        %709 = vmatprep.subr.bf16.mxu0 0
        %710 = vmatpush1.bf16.msra.mxu0 0
        %711 = vmatprep.subr.bf16.mxu0 0
        %712 = vmatpush1.bf16.msra.mxu0 0
        %713 = vmatprep.subr.bf16.mxu0 0
        %714 = vmatpush1.bf16.msra.mxu0 0
        %715 = vmatprep.subr.bf16.mxu0 %v436
        %716 = vmatpush1.bf16.msra.mxu0 %v433
        %717 = vmatprep.subr.bf16.mxu0 0
        %718 = vmatpush2.bf16.msra.mxu0 0
        %719 = vmatprep.subr.bf16.mxu0 0
        %720 = vmatpush2.bf16.msra.mxu0 0
        %721 = vmatprep.subr.bf16.mxu0 0
        %722 = vmatpush2.bf16.msra.mxu0 0
        %723 = vmatprep.subr.bf16.mxu0 0
        %724 = vmatpush2.bf16.msra.mxu0 0
        %725 = vmatprep.subr.bf16.mxu0 0
        %726 = vmatpush2.bf16.msra.mxu0 0
        %727 = vmatprep.subr.bf16.mxu0 0
        %728 = vmatpush2.bf16.msra.mxu0 0
        %729 = vmatprep.subr.bf16.mxu0 0
        %730 = vmatpush2.bf16.msra.mxu0 0
        %731 = vmatprep.subr.bf16.mxu0 0
        %732 = vmatpush2.bf16.msra.mxu0 0
        %733 = vmatprep.mubr.bf16.mxu0 0
        %734 = vmatmul.mubr.bf16.gmra.mxu0 %v390
        %v735 = vpop.f32.mrf.mxu0
        %v736 = vadd.f32 0.0, %v735
        %v737 = vpop.f32.mrf.mxu0
        %v738 = vadd.f32 0.0, %v737
        %v739 = vpop.f32.mrf.mxu0
        %v740 = vadd.f32 0.0, %v739
        %v741 = vpop.f32.mrf.mxu0
        %v742 = vadd.f32 0.0, %v741
        %743 = vdwg.mxu0
        %744 = vmatprep.subr.bf16.mxu0 0
        %745 = vmatpush1.bf16.msra.mxu0 0
        %746 = vmatprep.subr.bf16.mxu0 0
        %747 = vmatpush1.bf16.msra.mxu0 0
        %748 = vmatprep.subr.bf16.mxu0 0
        %749 = vmatpush1.bf16.msra.mxu0 0
        %750 = vmatprep.subr.bf16.mxu0 0
        %751 = vmatpush1.bf16.msra.mxu0 0
        %752 = vmatprep.subr.bf16.mxu0 0
        %753 = vmatpush1.bf16.msra.mxu0 0
        %754 = vmatprep.subr.bf16.mxu0 0
        %755 = vmatpush1.bf16.msra.mxu0 0
        %756 = vmatprep.subr.bf16.mxu0 0
        %757 = vmatpush1.bf16.msra.mxu0 0
        %758 = vmatprep.subr.bf16.mxu0 %v441
        %759 = vmatpush1.bf16.msra.mxu0 %v439
        %760 = vmatprep.subr.bf16.mxu0 0
        %761 = vmatpush2.bf16.msra.mxu0 0
        %762 = vmatprep.subr.bf16.mxu0 0
        %763 = vmatpush2.bf16.msra.mxu0 0
        %764 = vmatprep.subr.bf16.mxu0 0
        %765 = vmatpush2.bf16.msra.mxu0 0
        %766 = vmatprep.subr.bf16.mxu0 0
        %767 = vmatpush2.bf16.msra.mxu0 0
        %768 = vmatprep.subr.bf16.mxu0 0
        %769 = vmatpush2.bf16.msra.mxu0 0
        %770 = vmatprep.subr.bf16.mxu0 0
        %771 = vmatpush2.bf16.msra.mxu0 0
        %772 = vmatprep.subr.bf16.mxu0 0
        %773 = vmatpush2.bf16.msra.mxu0 0
        %774 = vmatprep.subr.bf16.mxu0 0
        %775 = vmatpush2.bf16.msra.mxu0 0
        %776 = vmatprep.mubr.bf16.mxu0 0
        %777 = vmatmul.mubr.bf16.gmra.mxu0 %v390
        %v778 = vpop.f32.mrf.mxu0
        %v779 = vadd.f32 0.0, %v778
        %v780 = vpop.f32.mrf.mxu0
        %v781 = vadd.f32 0.0, %v780
        %v782 = vpop.f32.mrf.mxu0
        %v783 = vadd.f32 0.0, %v782
        %v784 = vpop.f32.mrf.mxu0
        %v785 = vadd.f32 0.0, %v784
        %786 = vdwg.mxu0
        %v789 = vunpack.c.l.b16 %v262
        %v790 = vunpack.c.l.b16 %v263
        %v791 = vpack.c.b16 %v790, %v789
        %v793 = vsel %vm388, %v791, 0
        %v796 = vand.u32 %v315, %v395
        %v799 = vand.u32 %v316, %v395
        %v802 = vand.u32 %v317, %v395
        %v805 = vand.u32 %v318, %v395
        %v808 = vand.u32 %v319, %v395
        %v811 = vand.u32 %v320, %v395
        %v814 = vand.u32 %v321, %v395
        %v817 = vand.u32 %v322, %v395
        %v820 = vand.u32 %v323, %v395
        %v823 = vand.u32 %v324, %v395
        %v826 = vand.u32 %v325, %v395
        %v829 = vand.u32 %v326, %v395
        %v832 = vand.u32 %v327, %v395
        %v835 = vand.u32 %v328, %v395
        %v838 = vand.u32 %v329, %v395
        %v841 = vand.u32 %v330, %v395
        %843 = vmatprep.subr.bf16.mxu0 0
        %844 = vmatpush1.bf16.msra.mxu0 0
        %845 = vmatprep.subr.bf16.mxu0 0
        %846 = vmatpush1.bf16.msra.mxu0 0
        %847 = vmatprep.subr.bf16.mxu0 0
        %848 = vmatpush1.bf16.msra.mxu0 0
        %849 = vmatprep.subr.bf16.mxu0 0
        %850 = vmatpush1.bf16.msra.mxu0 0
        %851 = vmatprep.subr.bf16.mxu0 0
        %852 = vmatpush1.bf16.msra.mxu0 0
        %853 = vmatprep.subr.bf16.mxu0 0
        %854 = vmatpush1.bf16.msra.mxu0 0
        %855 = vmatprep.subr.bf16.mxu0 0
        %856 = vmatpush1.bf16.msra.mxu0 0
        %857 = vmatprep.subr.bf16.mxu0 %v799
        %858 = vmatpush1.bf16.msra.mxu0 %v796
        %859 = vmatprep.subr.bf16.mxu0 0
        %860 = vmatpush2.bf16.msra.mxu0 0
        %861 = vmatprep.subr.bf16.mxu0 0
        %862 = vmatpush2.bf16.msra.mxu0 0
        %863 = vmatprep.subr.bf16.mxu0 0
        %864 = vmatpush2.bf16.msra.mxu0 0
        %865 = vmatprep.subr.bf16.mxu0 0
        %866 = vmatpush2.bf16.msra.mxu0 0
        %867 = vmatprep.subr.bf16.mxu0 0
        %868 = vmatpush2.bf16.msra.mxu0 0
        %869 = vmatprep.subr.bf16.mxu0 0
        %870 = vmatpush2.bf16.msra.mxu0 0
        %871 = vmatprep.subr.bf16.mxu0 0
        %872 = vmatpush2.bf16.msra.mxu0 0
        %873 = vmatprep.subr.bf16.mxu0 0
        %874 = vmatpush2.bf16.msra.mxu0 0
        %875 = vmatprep.mubr.bf16.mxu0 0
        %876 = vmatmul.mubr.bf16.gmra.mxu0 %v793
        %v877 = vpop.f32.mrf.mxu0
        %v878 = vadd.f32 %v478, %v877
        %v879 = vpop.f32.mrf.mxu0
        %v880 = vadd.f32 %v480, %v879
        %v881 = vpop.f32.mrf.mxu0
        %v882 = vadd.f32 %v482, %v881
        %v883 = vpop.f32.mrf.mxu0
        %v884 = vadd.f32 %v484, %v883
        %885 = vdwg.mxu0
        %886 = vmatprep.subr.bf16.mxu0 0
        %887 = vmatpush1.bf16.msra.mxu0 0
        %888 = vmatprep.subr.bf16.mxu0 0
        %889 = vmatpush1.bf16.msra.mxu0 0
        %890 = vmatprep.subr.bf16.mxu0 0
        %891 = vmatpush1.bf16.msra.mxu0 0
        %892 = vmatprep.subr.bf16.mxu0 0
        %893 = vmatpush1.bf16.msra.mxu0 0
        %894 = vmatprep.subr.bf16.mxu0 0
        %895 = vmatpush1.bf16.msra.mxu0 0
        %896 = vmatprep.subr.bf16.mxu0 0
        %897 = vmatpush1.bf16.msra.mxu0 0
        %898 = vmatprep.subr.bf16.mxu0 0
        %899 = vmatpush1.bf16.msra.mxu0 0
        %900 = vmatprep.subr.bf16.mxu0 %v805
        %901 = vmatpush1.bf16.msra.mxu0 %v802
        %902 = vmatprep.subr.bf16.mxu0 0
        %903 = vmatpush2.bf16.msra.mxu0 0
        %904 = vmatprep.subr.bf16.mxu0 0
        %905 = vmatpush2.bf16.msra.mxu0 0
        %906 = vmatprep.subr.bf16.mxu0 0
        %907 = vmatpush2.bf16.msra.mxu0 0
        %908 = vmatprep.subr.bf16.mxu0 0
        %909 = vmatpush2.bf16.msra.mxu0 0
        %910 = vmatprep.subr.bf16.mxu0 0
        %911 = vmatpush2.bf16.msra.mxu0 0
        %912 = vmatprep.subr.bf16.mxu0 0
        %913 = vmatpush2.bf16.msra.mxu0 0
        %914 = vmatprep.subr.bf16.mxu0 0
        %915 = vmatpush2.bf16.msra.mxu0 0
        %916 = vmatprep.subr.bf16.mxu0 0
        %917 = vmatpush2.bf16.msra.mxu0 0
        %918 = vmatprep.mubr.bf16.mxu0 0
        %919 = vmatmul.mubr.bf16.gmra.mxu0 %v793
        %v920 = vpop.f32.mrf.mxu0
        %v921 = vadd.f32 %v521, %v920
        %v922 = vpop.f32.mrf.mxu0
        %v923 = vadd.f32 %v523, %v922
        %v924 = vpop.f32.mrf.mxu0
        %v925 = vadd.f32 %v525, %v924
        %v926 = vpop.f32.mrf.mxu0
        %v927 = vadd.f32 %v527, %v926
        %928 = vdwg.mxu0
        %929 = vmatprep.subr.bf16.mxu0 0
        %930 = vmatpush1.bf16.msra.mxu0 0
        %931 = vmatprep.subr.bf16.mxu0 0
        %932 = vmatpush1.bf16.msra.mxu0 0
        %933 = vmatprep.subr.bf16.mxu0 0
        %934 = vmatpush1.bf16.msra.mxu0 0
        %935 = vmatprep.subr.bf16.mxu0 0
        %936 = vmatpush1.bf16.msra.mxu0 0
        %937 = vmatprep.subr.bf16.mxu0 0
        %938 = vmatpush1.bf16.msra.mxu0 0
        %939 = vmatprep.subr.bf16.mxu0 0
        %940 = vmatpush1.bf16.msra.mxu0 0
        %941 = vmatprep.subr.bf16.mxu0 0
        %942 = vmatpush1.bf16.msra.mxu0 0
        %943 = vmatprep.subr.bf16.mxu0 %v811
        %944 = vmatpush1.bf16.msra.mxu0 %v808
        %945 = vmatprep.subr.bf16.mxu0 0
        %946 = vmatpush2.bf16.msra.mxu0 0
        %947 = vmatprep.subr.bf16.mxu0 0
        %948 = vmatpush2.bf16.msra.mxu0 0
        %949 = vmatprep.subr.bf16.mxu0 0
        %950 = vmatpush2.bf16.msra.mxu0 0
        %951 = vmatprep.subr.bf16.mxu0 0
        %952 = vmatpush2.bf16.msra.mxu0 0
        %953 = vmatprep.subr.bf16.mxu0 0
        %954 = vmatpush2.bf16.msra.mxu0 0
        %955 = vmatprep.subr.bf16.mxu0 0
        %956 = vmatpush2.bf16.msra.mxu0 0
        %957 = vmatprep.subr.bf16.mxu0 0
        %958 = vmatpush2.bf16.msra.mxu0 0
        %959 = vmatprep.subr.bf16.mxu0 0
        %960 = vmatpush2.bf16.msra.mxu0 0
        %961 = vmatprep.mubr.bf16.mxu0 0
        %962 = vmatmul.mubr.bf16.gmra.mxu0 %v793
        %v963 = vpop.f32.mrf.mxu0
        %v964 = vadd.f32 %v564, %v963
        %v965 = vpop.f32.mrf.mxu0
        %v966 = vadd.f32 %v566, %v965
        %v967 = vpop.f32.mrf.mxu0
        %v968 = vadd.f32 %v568, %v967
        %v969 = vpop.f32.mrf.mxu0
        %v970 = vadd.f32 %v570, %v969
        %971 = vdwg.mxu0
        %972 = vmatprep.subr.bf16.mxu0 0
        %973 = vmatpush1.bf16.msra.mxu0 0
        %974 = vmatprep.subr.bf16.mxu0 0
        %975 = vmatpush1.bf16.msra.mxu0 0
        %976 = vmatprep.subr.bf16.mxu0 0
        %977 = vmatpush1.bf16.msra.mxu0 0
        %978 = vmatprep.subr.bf16.mxu0 0
        %979 = vmatpush1.bf16.msra.mxu0 0
        %980 = vmatprep.subr.bf16.mxu0 0
        %981 = vmatpush1.bf16.msra.mxu0 0
        %982 = vmatprep.subr.bf16.mxu0 0
        %983 = vmatpush1.bf16.msra.mxu0 0
        %984 = vmatprep.subr.bf16.mxu0 0
        %985 = vmatpush1.bf16.msra.mxu0 0
        %986 = vmatprep.subr.bf16.mxu0 %v817
        %987 = vmatpush1.bf16.msra.mxu0 %v814
        %988 = vmatprep.subr.bf16.mxu0 0
        %989 = vmatpush2.bf16.msra.mxu0 0
        %990 = vmatprep.subr.bf16.mxu0 0
        %991 = vmatpush2.bf16.msra.mxu0 0
        %992 = vmatprep.subr.bf16.mxu0 0
        %993 = vmatpush2.bf16.msra.mxu0 0
        %994 = vmatprep.subr.bf16.mxu0 0
        %995 = vmatpush2.bf16.msra.mxu0 0
        %996 = vmatprep.subr.bf16.mxu0 0
        %997 = vmatpush2.bf16.msra.mxu0 0
        %998 = vmatprep.subr.bf16.mxu0 0
        %999 = vmatpush2.bf16.msra.mxu0 0
        %1000 = vmatprep.subr.bf16.mxu0 0
        %1001 = vmatpush2.bf16.msra.mxu0 0
        %1002 = vmatprep.subr.bf16.mxu0 0
        %1003 = vmatpush2.bf16.msra.mxu0 0
        %1004 = vmatprep.mubr.bf16.mxu0 0
        %1005 = vmatmul.mubr.bf16.gmra.mxu0 %v793
        %v1006 = vpop.f32.mrf.mxu0
        %v1007 = vadd.f32 %v607, %v1006
        %v1008 = vpop.f32.mrf.mxu0
        %v1009 = vadd.f32 %v609, %v1008
        %v1010 = vpop.f32.mrf.mxu0
        %v1011 = vadd.f32 %v611, %v1010
        %v1012 = vpop.f32.mrf.mxu0
        %v1013 = vadd.f32 %v613, %v1012
        %1014 = vdwg.mxu0
        %1015 = vmatprep.subr.bf16.mxu0 0
        %1016 = vmatpush1.bf16.msra.mxu0 0
        %1017 = vmatprep.subr.bf16.mxu0 0
        %1018 = vmatpush1.bf16.msra.mxu0 0
        %1019 = vmatprep.subr.bf16.mxu0 0
        %1020 = vmatpush1.bf16.msra.mxu0 0
        %1021 = vmatprep.subr.bf16.mxu0 0
        %1022 = vmatpush1.bf16.msra.mxu0 0
        %1023 = vmatprep.subr.bf16.mxu0 0
        %1024 = vmatpush1.bf16.msra.mxu0 0
        %1025 = vmatprep.subr.bf16.mxu0 0
        %1026 = vmatpush1.bf16.msra.mxu0 0
        %1027 = vmatprep.subr.bf16.mxu0 0
        %1028 = vmatpush1.bf16.msra.mxu0 0
        %1029 = vmatprep.subr.bf16.mxu0 %v823
        %1030 = vmatpush1.bf16.msra.mxu0 %v820
        %1031 = vmatprep.subr.bf16.mxu0 0
        %1032 = vmatpush2.bf16.msra.mxu0 0
        %1033 = vmatprep.subr.bf16.mxu0 0
        %1034 = vmatpush2.bf16.msra.mxu0 0
        %1035 = vmatprep.subr.bf16.mxu0 0
        %1036 = vmatpush2.bf16.msra.mxu0 0
        %1037 = vmatprep.subr.bf16.mxu0 0
        %1038 = vmatpush2.bf16.msra.mxu0 0
        %1039 = vmatprep.subr.bf16.mxu0 0
        %1040 = vmatpush2.bf16.msra.mxu0 0
        %1041 = vmatprep.subr.bf16.mxu0 0
        %1042 = vmatpush2.bf16.msra.mxu0 0
        %1043 = vmatprep.subr.bf16.mxu0 0
        %1044 = vmatpush2.bf16.msra.mxu0 0
        %1045 = vmatprep.subr.bf16.mxu0 0
        %1046 = vmatpush2.bf16.msra.mxu0 0
        %1047 = vmatprep.mubr.bf16.mxu0 0
        %1048 = vmatmul.mubr.bf16.gmra.mxu0 %v793
        %v1049 = vpop.f32.mrf.mxu0
        %v1050 = vadd.f32 %v650, %v1049
        %v1051 = vpop.f32.mrf.mxu0
        %v1052 = vadd.f32 %v652, %v1051
        %v1053 = vpop.f32.mrf.mxu0
        %v1054 = vadd.f32 %v654, %v1053
        %v1055 = vpop.f32.mrf.mxu0
        %v1056 = vadd.f32 %v656, %v1055
        %1057 = vdwg.mxu0
        %1058 = vmatprep.subr.bf16.mxu0 0
        %1059 = vmatpush1.bf16.msra.mxu0 0
        %1060 = vmatprep.subr.bf16.mxu0 0
        %1061 = vmatpush1.bf16.msra.mxu0 0
        %1062 = vmatprep.subr.bf16.mxu0 0
        %1063 = vmatpush1.bf16.msra.mxu0 0
        %1064 = vmatprep.subr.bf16.mxu0 0
        %1065 = vmatpush1.bf16.msra.mxu0 0
        %1066 = vmatprep.subr.bf16.mxu0 0
        %1067 = vmatpush1.bf16.msra.mxu0 0
        %1068 = vmatprep.subr.bf16.mxu0 0
        %1069 = vmatpush1.bf16.msra.mxu0 0
        %1070 = vmatprep.subr.bf16.mxu0 0
        %1071 = vmatpush1.bf16.msra.mxu0 0
        %1072 = vmatprep.subr.bf16.mxu0 %v829
        %1073 = vmatpush1.bf16.msra.mxu0 %v826
        %1074 = vmatprep.subr.bf16.mxu0 0
        %1075 = vmatpush2.bf16.msra.mxu0 0
        %1076 = vmatprep.subr.bf16.mxu0 0
        %1077 = vmatpush2.bf16.msra.mxu0 0
        %1078 = vmatprep.subr.bf16.mxu0 0
        %1079 = vmatpush2.bf16.msra.mxu0 0
        %1080 = vmatprep.subr.bf16.mxu0 0
        %1081 = vmatpush2.bf16.msra.mxu0 0
        %1082 = vmatprep.subr.bf16.mxu0 0
        %1083 = vmatpush2.bf16.msra.mxu0 0
        %1084 = vmatprep.subr.bf16.mxu0 0
        %1085 = vmatpush2.bf16.msra.mxu0 0
        %1086 = vmatprep.subr.bf16.mxu0 0
        %1087 = vmatpush2.bf16.msra.mxu0 0
        %1088 = vmatprep.subr.bf16.mxu0 0
        %1089 = vmatpush2.bf16.msra.mxu0 0
        %1090 = vmatprep.mubr.bf16.mxu0 0
        %1091 = vmatmul.mubr.bf16.gmra.mxu0 %v793
        %v1092 = vpop.f32.mrf.mxu0
        %v1093 = vadd.f32 %v693, %v1092
        %v1094 = vpop.f32.mrf.mxu0
        %v1095 = vadd.f32 %v695, %v1094
        %v1096 = vpop.f32.mrf.mxu0
        %v1097 = vadd.f32 %v697, %v1096
        %v1098 = vpop.f32.mrf.mxu0
        %v1099 = vadd.f32 %v699, %v1098
        %1100 = vdwg.mxu0
        %1101 = vmatprep.subr.bf16.mxu0 0
        %1102 = vmatpush1.bf16.msra.mxu0 0
        %1103 = vmatprep.subr.bf16.mxu0 0
        %1104 = vmatpush1.bf16.msra.mxu0 0
        %1105 = vmatprep.subr.bf16.mxu0 0
        %1106 = vmatpush1.bf16.msra.mxu0 0
        %1107 = vmatprep.subr.bf16.mxu0 0
        %1108 = vmatpush1.bf16.msra.mxu0 0
        %1109 = vmatprep.subr.bf16.mxu0 0
        %1110 = vmatpush1.bf16.msra.mxu0 0
        %1111 = vmatprep.subr.bf16.mxu0 0
        %1112 = vmatpush1.bf16.msra.mxu0 0
        %1113 = vmatprep.subr.bf16.mxu0 0
        %1114 = vmatpush1.bf16.msra.mxu0 0
        %1115 = vmatprep.subr.bf16.mxu0 %v835
        %1116 = vmatpush1.bf16.msra.mxu0 %v832
        %1117 = vmatprep.subr.bf16.mxu0 0
        %1118 = vmatpush2.bf16.msra.mxu0 0
        %1119 = vmatprep.subr.bf16.mxu0 0
        %1120 = vmatpush2.bf16.msra.mxu0 0
        %1121 = vmatprep.subr.bf16.mxu0 0
        %1122 = vmatpush2.bf16.msra.mxu0 0
        %1123 = vmatprep.subr.bf16.mxu0 0
        %1124 = vmatpush2.bf16.msra.mxu0 0
        %1125 = vmatprep.subr.bf16.mxu0 0
        %1126 = vmatpush2.bf16.msra.mxu0 0
        %1127 = vmatprep.subr.bf16.mxu0 0
        %1128 = vmatpush2.bf16.msra.mxu0 0
        %1129 = vmatprep.subr.bf16.mxu0 0
        %1130 = vmatpush2.bf16.msra.mxu0 0
        %1131 = vmatprep.subr.bf16.mxu0 0
        %1132 = vmatpush2.bf16.msra.mxu0 0
        %1133 = vmatprep.mubr.bf16.mxu0 0
        %1134 = vmatmul.mubr.bf16.gmra.mxu0 %v793
        %v1135 = vpop.f32.mrf.mxu0
        %v1136 = vadd.f32 %v736, %v1135
        %v1137 = vpop.f32.mrf.mxu0
        %v1138 = vadd.f32 %v738, %v1137
        %v1139 = vpop.f32.mrf.mxu0
        %v1140 = vadd.f32 %v740, %v1139
        %v1141 = vpop.f32.mrf.mxu0
        %v1142 = vadd.f32 %v742, %v1141
        %1143 = vdwg.mxu0
        %1144 = vmatprep.subr.bf16.mxu0 0
        %1145 = vmatpush1.bf16.msra.mxu0 0
        %1146 = vmatprep.subr.bf16.mxu0 0
        %1147 = vmatpush1.bf16.msra.mxu0 0
        %1148 = vmatprep.subr.bf16.mxu0 0
        %1149 = vmatpush1.bf16.msra.mxu0 0
        %1150 = vmatprep.subr.bf16.mxu0 0
        %1151 = vmatpush1.bf16.msra.mxu0 0
        %1152 = vmatprep.subr.bf16.mxu0 0
        %1153 = vmatpush1.bf16.msra.mxu0 0
        %1154 = vmatprep.subr.bf16.mxu0 0
        %1155 = vmatpush1.bf16.msra.mxu0 0
        %1156 = vmatprep.subr.bf16.mxu0 0
        %1157 = vmatpush1.bf16.msra.mxu0 0
        %1158 = vmatprep.subr.bf16.mxu0 %v841
        %1159 = vmatpush1.bf16.msra.mxu0 %v838
        %1160 = vmatprep.subr.bf16.mxu0 0
        %1161 = vmatpush2.bf16.msra.mxu0 0
        %1162 = vmatprep.subr.bf16.mxu0 0
        %1163 = vmatpush2.bf16.msra.mxu0 0
        %1164 = vmatprep.subr.bf16.mxu0 0
        %1165 = vmatpush2.bf16.msra.mxu0 0
        %1166 = vmatprep.subr.bf16.mxu0 0
        %1167 = vmatpush2.bf16.msra.mxu0 0
        %1168 = vmatprep.subr.bf16.mxu0 0
        %1169 = vmatpush2.bf16.msra.mxu0 0
        %1170 = vmatprep.subr.bf16.mxu0 0
        %1171 = vmatpush2.bf16.msra.mxu0 0
        %1172 = vmatprep.subr.bf16.mxu0 0
        %1173 = vmatpush2.bf16.msra.mxu0 0
        %1174 = vmatprep.subr.bf16.mxu0 0
        %1175 = vmatpush2.bf16.msra.mxu0 0
        %1176 = vmatprep.mubr.bf16.mxu0 0
        %1177 = vmatmul.mubr.bf16.gmra.mxu0 %v793
        %v1178 = vpop.f32.mrf.mxu0
        %v1179 = vadd.f32 %v779, %v1178
        %v1180 = vpop.f32.mrf.mxu0
        %v1181 = vadd.f32 %v781, %v1180
        %v1182 = vpop.f32.mrf.mxu0
        %v1183 = vadd.f32 %v783, %v1182
        %v1184 = vpop.f32.mrf.mxu0
        %v1185 = vadd.f32 %v785, %v1184
        %1186 = vdwg.mxu0
        %s1187 = scalar_lea.vmem %s1, 16
        %v1188 = vld [vmem:[%s1187] sm:$0xf]
        %v1189 = vld [vmem:[%s1187 + $0x4] sm:$0xf]
        %1190 = vrot.lane.b32.xlu0 %v315, 126
        %v1191 = vpop.permute.xlu0 %1190
        %1192 = vrot.lane.b32.xlu0 %v316, 126
        %v1193 = vpop.permute.xlu0 %1192
        %1194 = vrot.lane.b32.xlu0 %v317, 126
        %v1195 = vpop.permute.xlu0 %1194
        %1196 = vrot.lane.b32.xlu0 %v318, 126
        %v1197 = vpop.permute.xlu0 %1196
        %1198 = vrot.lane.b32.xlu0 %v319, 126
        %v1199 = vpop.permute.xlu0 %1198
        %1200 = vrot.lane.b32.xlu0 %v320, 126
        %v1201 = vpop.permute.xlu0 %1200
        %1202 = vrot.lane.b32.xlu0 %v321, 126
        %v1203 = vpop.permute.xlu0 %1202
        %1204 = vrot.lane.b32.xlu0 %v322, 126
        %v1205 = vpop.permute.xlu0 %1204
        %1206 = vrot.lane.b32.xlu0 %v323, 126
        %v1207 = vpop.permute.xlu0 %1206
        %1208 = vrot.lane.b32.xlu0 %v324, 126
        %v1209 = vpop.permute.xlu0 %1208
        %1210 = vrot.lane.b32.xlu0 %v325, 126
        %v1211 = vpop.permute.xlu0 %1210
        %1212 = vrot.lane.b32.xlu0 %v326, 126
        %v1213 = vpop.permute.xlu0 %1212
        %1214 = vrot.lane.b32.xlu0 %v327, 126
        %v1215 = vpop.permute.xlu0 %1214
        %1216 = vrot.lane.b32.xlu0 %v328, 126
        %v1217 = vpop.permute.xlu0 %1216
        %1218 = vrot.lane.b32.xlu0 %v329, 126
        %v1219 = vpop.permute.xlu0 %1218
        %1220 = vrot.lane.b32.xlu0 %v330, 126
        %v1221 = vpop.permute.xlu0 %1220
        %vm1222 = vcmask 1031168
        %v1223 = vsel %vm1222, %v1191, %v1193
        %v1224 = vsel %vm1222, %v1193, %v1195
        %v1225 = vsel %vm1222, %v1195, %v1197
        %v1226 = vsel %vm1222, %v1197, %v1199
        %v1227 = vsel %vm1222, %v1199, %v1201
        %v1228 = vsel %vm1222, %v1201, %v1203
        %v1229 = vsel %vm1222, %v1203, %v1205
        %v1230 = vsel %vm1222, %v1205, %v1207
        %v1231 = vsel %vm1222, %v1207, %v1209
        %v1232 = vsel %vm1222, %v1209, %v1211
        %v1233 = vsel %vm1222, %v1211, %v1213
        %v1234 = vsel %vm1222, %v1213, %v1215
        %v1235 = vsel %vm1222, %v1215, %v1217
        %v1236 = vsel %vm1222, %v1217, %v1219
        %v1237 = vsel %vm1222, %v1219, %v1221
        %vm1238 = vcmask 1031168
        %v1240 = vsel %vm1238, %v1221, 0
        %v1243 = vunpack.c.l.b16 %v1188
        %v1244 = vunpack.c.l.b16 %v1189
        %v1245 = vpack.c.b16 %v1244, %v1243
        %v1247 = vsel %vm388, %v1245, 0
        %v1250 = vand.u32 %v1223, %v395
        %v1253 = vand.u32 %v1224, %v395
        %v1256 = vand.u32 %v1225, %v395
        %v1259 = vand.u32 %v1226, %v395
        %v1262 = vand.u32 %v1227, %v395
        %v1265 = vand.u32 %v1228, %v395
        %v1268 = vand.u32 %v1229, %v395
        %v1271 = vand.u32 %v1230, %v395
        %v1274 = vand.u32 %v1231, %v395
        %v1277 = vand.u32 %v1232, %v395
        %v1280 = vand.u32 %v1233, %v395
        %v1283 = vand.u32 %v1234, %v395
        %v1286 = vand.u32 %v1235, %v395
        %v1289 = vand.u32 %v1236, %v395
        %v1292 = vand.u32 %v1237, %v395
        %v1294 = vand.u32 %v1240, %v395
        %1296 = vmatprep.subr.bf16.mxu0 0
        %1297 = vmatpush1.bf16.msra.mxu0 0
        %1298 = vmatprep.subr.bf16.mxu0 0
        %1299 = vmatpush1.bf16.msra.mxu0 0
        %1300 = vmatprep.subr.bf16.mxu0 0
        %1301 = vmatpush1.bf16.msra.mxu0 0
        %1302 = vmatprep.subr.bf16.mxu0 0
        %1303 = vmatpush1.bf16.msra.mxu0 0
        %1304 = vmatprep.subr.bf16.mxu0 0
        %1305 = vmatpush1.bf16.msra.mxu0 0
        %1306 = vmatprep.subr.bf16.mxu0 0
        %1307 = vmatpush1.bf16.msra.mxu0 0
        %1308 = vmatprep.subr.bf16.mxu0 0
        %1309 = vmatpush1.bf16.msra.mxu0 0
        %1310 = vmatprep.subr.bf16.mxu0 %v1253
        %1311 = vmatpush1.bf16.msra.mxu0 %v1250
        %1312 = vmatprep.subr.bf16.mxu0 0
        %1313 = vmatpush2.bf16.msra.mxu0 0
        %1314 = vmatprep.subr.bf16.mxu0 0
        %1315 = vmatpush2.bf16.msra.mxu0 0
        %1316 = vmatprep.subr.bf16.mxu0 0
        %1317 = vmatpush2.bf16.msra.mxu0 0
        %1318 = vmatprep.subr.bf16.mxu0 0
        %1319 = vmatpush2.bf16.msra.mxu0 0
        %1320 = vmatprep.subr.bf16.mxu0 0
        %1321 = vmatpush2.bf16.msra.mxu0 0
        %1322 = vmatprep.subr.bf16.mxu0 0
        %1323 = vmatpush2.bf16.msra.mxu0 0
        %1324 = vmatprep.subr.bf16.mxu0 0
        %1325 = vmatpush2.bf16.msra.mxu0 0
        %1326 = vmatprep.subr.bf16.mxu0 0
        %1327 = vmatpush2.bf16.msra.mxu0 0
        %1328 = vmatprep.mubr.bf16.mxu0 0
        %1329 = vmatmul.mubr.bf16.gmra.mxu0 %v1247
        %v1330 = vpop.f32.mrf.mxu0
        %v1331 = vadd.f32 0.0, %v1330
        %v1332 = vpop.f32.mrf.mxu0
        %v1333 = vadd.f32 0.0, %v1332
        %v1334 = vpop.f32.mrf.mxu0
        %v1335 = vadd.f32 0.0, %v1334
        %v1336 = vpop.f32.mrf.mxu0
        %v1337 = vadd.f32 0.0, %v1336
        %1338 = vdwg.mxu0
        %1339 = vmatprep.subr.bf16.mxu0 0
        %1340 = vmatpush1.bf16.msra.mxu0 0
        %1341 = vmatprep.subr.bf16.mxu0 0
        %1342 = vmatpush1.bf16.msra.mxu0 0
        %1343 = vmatprep.subr.bf16.mxu0 0
        %1344 = vmatpush1.bf16.msra.mxu0 0
        %1345 = vmatprep.subr.bf16.mxu0 0
        %1346 = vmatpush1.bf16.msra.mxu0 0
        %1347 = vmatprep.subr.bf16.mxu0 0
        %1348 = vmatpush1.bf16.msra.mxu0 0
        %1349 = vmatprep.subr.bf16.mxu0 0
        %1350 = vmatpush1.bf16.msra.mxu0 0
        %1351 = vmatprep.subr.bf16.mxu0 0
        %1352 = vmatpush1.bf16.msra.mxu0 0
        %1353 = vmatprep.subr.bf16.mxu0 %v1259
        %1354 = vmatpush1.bf16.msra.mxu0 %v1256
        %1355 = vmatprep.subr.bf16.mxu0 0
        %1356 = vmatpush2.bf16.msra.mxu0 0
        %1357 = vmatprep.subr.bf16.mxu0 0
        %1358 = vmatpush2.bf16.msra.mxu0 0
        %1359 = vmatprep.subr.bf16.mxu0 0
        %1360 = vmatpush2.bf16.msra.mxu0 0
        %1361 = vmatprep.subr.bf16.mxu0 0
        %1362 = vmatpush2.bf16.msra.mxu0 0
        %1363 = vmatprep.subr.bf16.mxu0 0
        %1364 = vmatpush2.bf16.msra.mxu0 0
        %1365 = vmatprep.subr.bf16.mxu0 0
        %1366 = vmatpush2.bf16.msra.mxu0 0
        %1367 = vmatprep.subr.bf16.mxu0 0
        %1368 = vmatpush2.bf16.msra.mxu0 0
        %1369 = vmatprep.subr.bf16.mxu0 0
        %1370 = vmatpush2.bf16.msra.mxu0 0
        %1371 = vmatprep.mubr.bf16.mxu0 0
        %1372 = vmatmul.mubr.bf16.gmra.mxu0 %v1247
        %v1373 = vpop.f32.mrf.mxu0
        %v1374 = vadd.f32 0.0, %v1373
        %v1375 = vpop.f32.mrf.mxu0
        %v1376 = vadd.f32 0.0, %v1375
        %v1377 = vpop.f32.mrf.mxu0
        %v1378 = vadd.f32 0.0, %v1377
        %v1379 = vpop.f32.mrf.mxu0
        %v1380 = vadd.f32 0.0, %v1379
        %1381 = vdwg.mxu0
        %1382 = vmatprep.subr.bf16.mxu0 0
        %1383 = vmatpush1.bf16.msra.mxu0 0
        %1384 = vmatprep.subr.bf16.mxu0 0
        %1385 = vmatpush1.bf16.msra.mxu0 0
        %1386 = vmatprep.subr.bf16.mxu0 0
        %1387 = vmatpush1.bf16.msra.mxu0 0
        %1388 = vmatprep.subr.bf16.mxu0 0
        %1389 = vmatpush1.bf16.msra.mxu0 0
        %1390 = vmatprep.subr.bf16.mxu0 0
        %1391 = vmatpush1.bf16.msra.mxu0 0
        %1392 = vmatprep.subr.bf16.mxu0 0
        %1393 = vmatpush1.bf16.msra.mxu0 0
        %1394 = vmatprep.subr.bf16.mxu0 0
        %1395 = vmatpush1.bf16.msra.mxu0 0
        %1396 = vmatprep.subr.bf16.mxu0 %v1265
        %1397 = vmatpush1.bf16.msra.mxu0 %v1262
        %1398 = vmatprep.subr.bf16.mxu0 0
        %1399 = vmatpush2.bf16.msra.mxu0 0
        %1400 = vmatprep.subr.bf16.mxu0 0
        %1401 = vmatpush2.bf16.msra.mxu0 0
        %1402 = vmatprep.subr.bf16.mxu0 0
        %1403 = vmatpush2.bf16.msra.mxu0 0
        %1404 = vmatprep.subr.bf16.mxu0 0
        %1405 = vmatpush2.bf16.msra.mxu0 0
        %1406 = vmatprep.subr.bf16.mxu0 0
        %1407 = vmatpush2.bf16.msra.mxu0 0
        %1408 = vmatprep.subr.bf16.mxu0 0
        %1409 = vmatpush2.bf16.msra.mxu0 0
        %1410 = vmatprep.subr.bf16.mxu0 0
        %1411 = vmatpush2.bf16.msra.mxu0 0
        %1412 = vmatprep.subr.bf16.mxu0 0
        %1413 = vmatpush2.bf16.msra.mxu0 0
        %1414 = vmatprep.mubr.bf16.mxu0 0
        %1415 = vmatmul.mubr.bf16.gmra.mxu0 %v1247
        %v1416 = vpop.f32.mrf.mxu0
        %v1417 = vadd.f32 0.0, %v1416
        %v1418 = vpop.f32.mrf.mxu0
        %v1419 = vadd.f32 0.0, %v1418
        %v1420 = vpop.f32.mrf.mxu0
        %v1421 = vadd.f32 0.0, %v1420
        %v1422 = vpop.f32.mrf.mxu0
        %v1423 = vadd.f32 0.0, %v1422
        %1424 = vdwg.mxu0
        %1425 = vmatprep.subr.bf16.mxu0 0
        %1426 = vmatpush1.bf16.msra.mxu0 0
        %1427 = vmatprep.subr.bf16.mxu0 0
        %1428 = vmatpush1.bf16.msra.mxu0 0
        %1429 = vmatprep.subr.bf16.mxu0 0
        %1430 = vmatpush1.bf16.msra.mxu0 0
        %1431 = vmatprep.subr.bf16.mxu0 0
        %1432 = vmatpush1.bf16.msra.mxu0 0
        %1433 = vmatprep.subr.bf16.mxu0 0
        %1434 = vmatpush1.bf16.msra.mxu0 0
        %1435 = vmatprep.subr.bf16.mxu0 0
        %1436 = vmatpush1.bf16.msra.mxu0 0
        %1437 = vmatprep.subr.bf16.mxu0 0
        %1438 = vmatpush1.bf16.msra.mxu0 0
        %1439 = vmatprep.subr.bf16.mxu0 %v1271
        %1440 = vmatpush1.bf16.msra.mxu0 %v1268
        %1441 = vmatprep.subr.bf16.mxu0 0
        %1442 = vmatpush2.bf16.msra.mxu0 0
        %1443 = vmatprep.subr.bf16.mxu0 0
        %1444 = vmatpush2.bf16.msra.mxu0 0
        %1445 = vmatprep.subr.bf16.mxu0 0
        %1446 = vmatpush2.bf16.msra.mxu0 0
        %1447 = vmatprep.subr.bf16.mxu0 0
        %1448 = vmatpush2.bf16.msra.mxu0 0
        %1449 = vmatprep.subr.bf16.mxu0 0
        %1450 = vmatpush2.bf16.msra.mxu0 0
        %1451 = vmatprep.subr.bf16.mxu0 0
        %1452 = vmatpush2.bf16.msra.mxu0 0
        %1453 = vmatprep.subr.bf16.mxu0 0
        %1454 = vmatpush2.bf16.msra.mxu0 0
        %1455 = vmatprep.subr.bf16.mxu0 0
        %1456 = vmatpush2.bf16.msra.mxu0 0
        %1457 = vmatprep.mubr.bf16.mxu0 0
        %1458 = vmatmul.mubr.bf16.gmra.mxu0 %v1247
        %v1459 = vpop.f32.mrf.mxu0
        %v1460 = vadd.f32 0.0, %v1459
        %v1461 = vpop.f32.mrf.mxu0
        %v1462 = vadd.f32 0.0, %v1461
        %v1463 = vpop.f32.mrf.mxu0
        %v1464 = vadd.f32 0.0, %v1463
        %v1465 = vpop.f32.mrf.mxu0
        %v1466 = vadd.f32 0.0, %v1465
        %1467 = vdwg.mxu0
        %1468 = vmatprep.subr.bf16.mxu0 0
        %1469 = vmatpush1.bf16.msra.mxu0 0
        %1470 = vmatprep.subr.bf16.mxu0 0
        %1471 = vmatpush1.bf16.msra.mxu0 0
        %1472 = vmatprep.subr.bf16.mxu0 0
        %1473 = vmatpush1.bf16.msra.mxu0 0
        %1474 = vmatprep.subr.bf16.mxu0 0
        %1475 = vmatpush1.bf16.msra.mxu0 0
        %1476 = vmatprep.subr.bf16.mxu0 0
        %1477 = vmatpush1.bf16.msra.mxu0 0
        %1478 = vmatprep.subr.bf16.mxu0 0
        %1479 = vmatpush1.bf16.msra.mxu0 0
        %1480 = vmatprep.subr.bf16.mxu0 0
        %1481 = vmatpush1.bf16.msra.mxu0 0
        %1482 = vmatprep.subr.bf16.mxu0 %v1277
        %1483 = vmatpush1.bf16.msra.mxu0 %v1274
        %1484 = vmatprep.subr.bf16.mxu0 0
        %1485 = vmatpush2.bf16.msra.mxu0 0
        %1486 = vmatprep.subr.bf16.mxu0 0
        %1487 = vmatpush2.bf16.msra.mxu0 0
        %1488 = vmatprep.subr.bf16.mxu0 0
        %1489 = vmatpush2.bf16.msra.mxu0 0
        %1490 = vmatprep.subr.bf16.mxu0 0
        %1491 = vmatpush2.bf16.msra.mxu0 0
        %1492 = vmatprep.subr.bf16.mxu0 0
        %1493 = vmatpush2.bf16.msra.mxu0 0
        %1494 = vmatprep.subr.bf16.mxu0 0
        %1495 = vmatpush2.bf16.msra.mxu0 0
        %1496 = vmatprep.subr.bf16.mxu0 0
        %1497 = vmatpush2.bf16.msra.mxu0 0
        %1498 = vmatprep.subr.bf16.mxu0 0
        %1499 = vmatpush2.bf16.msra.mxu0 0
        %1500 = vmatprep.mubr.bf16.mxu0 0
        %1501 = vmatmul.mubr.bf16.gmra.mxu0 %v1247
        %v1502 = vpop.f32.mrf.mxu0
        %v1503 = vadd.f32 0.0, %v1502
        %v1504 = vpop.f32.mrf.mxu0
        %v1505 = vadd.f32 0.0, %v1504
        %v1506 = vpop.f32.mrf.mxu0
        %v1507 = vadd.f32 0.0, %v1506
        %v1508 = vpop.f32.mrf.mxu0
        %v1509 = vadd.f32 0.0, %v1508
        %1510 = vdwg.mxu0
        %1511 = vmatprep.subr.bf16.mxu0 0
        %1512 = vmatpush1.bf16.msra.mxu0 0
        %1513 = vmatprep.subr.bf16.mxu0 0
        %1514 = vmatpush1.bf16.msra.mxu0 0
        %1515 = vmatprep.subr.bf16.mxu0 0
        %1516 = vmatpush1.bf16.msra.mxu0 0
        %1517 = vmatprep.subr.bf16.mxu0 0
        %1518 = vmatpush1.bf16.msra.mxu0 0
        %1519 = vmatprep.subr.bf16.mxu0 0
        %1520 = vmatpush1.bf16.msra.mxu0 0
        %1521 = vmatprep.subr.bf16.mxu0 0
        %1522 = vmatpush1.bf16.msra.mxu0 0
        %1523 = vmatprep.subr.bf16.mxu0 0
        %1524 = vmatpush1.bf16.msra.mxu0 0
        %1525 = vmatprep.subr.bf16.mxu0 %v1283
        %1526 = vmatpush1.bf16.msra.mxu0 %v1280
        %1527 = vmatprep.subr.bf16.mxu0 0
        %1528 = vmatpush2.bf16.msra.mxu0 0
        %1529 = vmatprep.subr.bf16.mxu0 0
        %1530 = vmatpush2.bf16.msra.mxu0 0
        %1531 = vmatprep.subr.bf16.mxu0 0
        %1532 = vmatpush2.bf16.msra.mxu0 0
        %1533 = vmatprep.subr.bf16.mxu0 0
        %1534 = vmatpush2.bf16.msra.mxu0 0
        %1535 = vmatprep.subr.bf16.mxu0 0
        %1536 = vmatpush2.bf16.msra.mxu0 0
        %1537 = vmatprep.subr.bf16.mxu0 0
        %1538 = vmatpush2.bf16.msra.mxu0 0
        %1539 = vmatprep.subr.bf16.mxu0 0
        %1540 = vmatpush2.bf16.msra.mxu0 0
        %1541 = vmatprep.subr.bf16.mxu0 0
        %1542 = vmatpush2.bf16.msra.mxu0 0
        %1543 = vmatprep.mubr.bf16.mxu0 0
        %1544 = vmatmul.mubr.bf16.gmra.mxu0 %v1247
        %v1545 = vpop.f32.mrf.mxu0
        %v1546 = vadd.f32 0.0, %v1545
        %v1547 = vpop.f32.mrf.mxu0
        %v1548 = vadd.f32 0.0, %v1547
        %v1549 = vpop.f32.mrf.mxu0
        %v1550 = vadd.f32 0.0, %v1549
        %v1551 = vpop.f32.mrf.mxu0
        %v1552 = vadd.f32 0.0, %v1551
        %1553 = vdwg.mxu0
        %1554 = vmatprep.subr.bf16.mxu0 0
        %1555 = vmatpush1.bf16.msra.mxu0 0
        %1556 = vmatprep.subr.bf16.mxu0 0
        %1557 = vmatpush1.bf16.msra.mxu0 0
        %1558 = vmatprep.subr.bf16.mxu0 0
        %1559 = vmatpush1.bf16.msra.mxu0 0
        %1560 = vmatprep.subr.bf16.mxu0 0
        %1561 = vmatpush1.bf16.msra.mxu0 0
        %1562 = vmatprep.subr.bf16.mxu0 0
        %1563 = vmatpush1.bf16.msra.mxu0 0
        %1564 = vmatprep.subr.bf16.mxu0 0
        %1565 = vmatpush1.bf16.msra.mxu0 0
        %1566 = vmatprep.subr.bf16.mxu0 0
        %1567 = vmatpush1.bf16.msra.mxu0 0
        %1568 = vmatprep.subr.bf16.mxu0 %v1289
        %1569 = vmatpush1.bf16.msra.mxu0 %v1286
        %1570 = vmatprep.subr.bf16.mxu0 0
        %1571 = vmatpush2.bf16.msra.mxu0 0
        %1572 = vmatprep.subr.bf16.mxu0 0
        %1573 = vmatpush2.bf16.msra.mxu0 0
        %1574 = vmatprep.subr.bf16.mxu0 0
        %1575 = vmatpush2.bf16.msra.mxu0 0
        %1576 = vmatprep.subr.bf16.mxu0 0
        %1577 = vmatpush2.bf16.msra.mxu0 0
        %1578 = vmatprep.subr.bf16.mxu0 0
        %1579 = vmatpush2.bf16.msra.mxu0 0
        %1580 = vmatprep.subr.bf16.mxu0 0
        %1581 = vmatpush2.bf16.msra.mxu0 0
        %1582 = vmatprep.subr.bf16.mxu0 0
        %1583 = vmatpush2.bf16.msra.mxu0 0
        %1584 = vmatprep.subr.bf16.mxu0 0
        %1585 = vmatpush2.bf16.msra.mxu0 0
        %1586 = vmatprep.mubr.bf16.mxu0 0
        %1587 = vmatmul.mubr.bf16.gmra.mxu0 %v1247
        %v1588 = vpop.f32.mrf.mxu0
        %v1589 = vadd.f32 0.0, %v1588
        %v1590 = vpop.f32.mrf.mxu0
        %v1591 = vadd.f32 0.0, %v1590
        %v1592 = vpop.f32.mrf.mxu0
        %v1593 = vadd.f32 0.0, %v1592
        %v1594 = vpop.f32.mrf.mxu0
        %v1595 = vadd.f32 0.0, %v1594
        %1596 = vdwg.mxu0
        %1597 = vmatprep.subr.bf16.mxu0 0
        %1598 = vmatpush1.bf16.msra.mxu0 0
        %1599 = vmatprep.subr.bf16.mxu0 0
        %1600 = vmatpush1.bf16.msra.mxu0 0
        %1601 = vmatprep.subr.bf16.mxu0 0
        %1602 = vmatpush1.bf16.msra.mxu0 0
        %1603 = vmatprep.subr.bf16.mxu0 0
        %1604 = vmatpush1.bf16.msra.mxu0 0
        %1605 = vmatprep.subr.bf16.mxu0 0
        %1606 = vmatpush1.bf16.msra.mxu0 0
        %1607 = vmatprep.subr.bf16.mxu0 0
        %1608 = vmatpush1.bf16.msra.mxu0 0
        %1609 = vmatprep.subr.bf16.mxu0 0
        %1610 = vmatpush1.bf16.msra.mxu0 0
        %1611 = vmatprep.subr.bf16.mxu0 %v1294
        %1612 = vmatpush1.bf16.msra.mxu0 %v1292
        %1613 = vmatprep.subr.bf16.mxu0 0
        %1614 = vmatpush2.bf16.msra.mxu0 0
        %1615 = vmatprep.subr.bf16.mxu0 0
        %1616 = vmatpush2.bf16.msra.mxu0 0
        %1617 = vmatprep.subr.bf16.mxu0 0
        %1618 = vmatpush2.bf16.msra.mxu0 0
        %1619 = vmatprep.subr.bf16.mxu0 0
        %1620 = vmatpush2.bf16.msra.mxu0 0
        %1621 = vmatprep.subr.bf16.mxu0 0
        %1622 = vmatpush2.bf16.msra.mxu0 0
        %1623 = vmatprep.subr.bf16.mxu0 0
        %1624 = vmatpush2.bf16.msra.mxu0 0
        %1625 = vmatprep.subr.bf16.mxu0 0
        %1626 = vmatpush2.bf16.msra.mxu0 0
        %1627 = vmatprep.subr.bf16.mxu0 0
        %1628 = vmatpush2.bf16.msra.mxu0 0
        %1629 = vmatprep.mubr.bf16.mxu0 0
        %1630 = vmatmul.mubr.bf16.gmra.mxu0 %v1247
        %v1631 = vpop.f32.mrf.mxu0
        %v1632 = vadd.f32 0.0, %v1631
        %v1633 = vpop.f32.mrf.mxu0
        %v1634 = vadd.f32 0.0, %v1633
        %v1635 = vpop.f32.mrf.mxu0
        %v1636 = vadd.f32 0.0, %v1635
        %v1637 = vpop.f32.mrf.mxu0
        %v1638 = vadd.f32 0.0, %v1637
        %1639 = vdwg.mxu0
        %v1640 = vadd.f32 %v878, %v1331
        %v1641 = vadd.f32 %v880, %v1333
        %v1642 = vadd.f32 %v921, %v1374
        %v1643 = vadd.f32 %v923, %v1376
        %v1644 = vadd.f32 %v964, %v1417
        %v1645 = vadd.f32 %v966, %v1419
        %v1646 = vadd.f32 %v1007, %v1460
        %v1647 = vadd.f32 %v1009, %v1462
        %v1648 = vadd.f32 %v1050, %v1503
        %v1649 = vadd.f32 %v1052, %v1505
        %v1650 = vadd.f32 %v1093, %v1546
        %v1651 = vadd.f32 %v1095, %v1548
        %v1652 = vadd.f32 %v1136, %v1589
        %v1653 = vadd.f32 %v1138, %v1591
        %v1654 = vadd.f32 %v1179, %v1632
        %v1655 = vadd.f32 %v1181, %v1634
        %v1656 = vadd.f32 %v882, %v1335
        %v1657 = vadd.f32 %v884, %v1337
        %v1658 = vadd.f32 %v925, %v1378
        %v1659 = vadd.f32 %v927, %v1380
        %v1660 = vadd.f32 %v968, %v1421
        %v1661 = vadd.f32 %v970, %v1423
        %v1662 = vadd.f32 %v1011, %v1464
        %v1663 = vadd.f32 %v1013, %v1466
        %v1664 = vadd.f32 %v1054, %v1507
        %v1665 = vadd.f32 %v1056, %v1509
        %v1666 = vadd.f32 %v1097, %v1550
        %v1667 = vadd.f32 %v1099, %v1552
        %v1668 = vadd.f32 %v1140, %v1593
        %v1669 = vadd.f32 %v1142, %v1595
        %v1670 = vadd.f32 %v1183, %v1636
        %v1671 = vadd.f32 %v1185, %v1638
        %v1672 = vld [vmem:[%s2] sm:$0xff]
        %v1673 = vld [vmem:[%s2 + $0x8] sm:$0xff]
        %1675 = vset.pattern.permute.xlu0 0
        %1676 = vperm.xlu0 %1675, %v1672
        %v1677 = vpop.permute.xlu0 %1676
        %1680 = vset.pattern.permute.xlu0 0
        %1681 = vperm.xlu0 %1680, %v1673
        %v1682 = vpop.permute.xlu0 %1681
        %v1684 = vadd.f32 %v1640, %v1677
        %v1685 = vadd.f32 %v1641, %v1677
        %v1686 = vadd.f32 %v1642, %v1677
        %v1687 = vadd.f32 %v1643, %v1677
        %v1688 = vadd.f32 %v1644, %v1677
        %v1689 = vadd.f32 %v1645, %v1677
        %v1690 = vadd.f32 %v1646, %v1677
        %v1691 = vadd.f32 %v1647, %v1677
        %v1692 = vadd.f32 %v1648, %v1677
        %v1693 = vadd.f32 %v1649, %v1677
        %v1694 = vadd.f32 %v1650, %v1677
        %v1695 = vadd.f32 %v1651, %v1677
        %v1696 = vadd.f32 %v1652, %v1677
        %v1697 = vadd.f32 %v1653, %v1677
        %v1698 = vadd.f32 %v1654, %v1677
        %v1699 = vadd.f32 %v1655, %v1677
        %v1700 = vadd.f32 %v1656, %v1682
        %v1701 = vadd.f32 %v1657, %v1682
        %v1702 = vadd.f32 %v1658, %v1682
        %v1703 = vadd.f32 %v1659, %v1682
        %v1704 = vadd.f32 %v1660, %v1682
        %v1705 = vadd.f32 %v1661, %v1682
        %v1706 = vadd.f32 %v1662, %v1682
        %v1707 = vadd.f32 %v1663, %v1682
        %v1708 = vadd.f32 %v1664, %v1682
        %v1709 = vadd.f32 %v1665, %v1682
        %v1710 = vadd.f32 %v1666, %v1682
        %v1711 = vadd.f32 %v1667, %v1682
        %v1712 = vadd.f32 %v1668, %v1682
        %v1713 = vadd.f32 %v1669, %v1682
        %v1714 = vadd.f32 %v1670, %v1682
        %v1715 = vadd.f32 %v1671, %v1682
        %v1716 = vmax.f32 %v1684, 0.0
        %v1717 = vmax.f32 %v1685, 0.0
        %v1718 = vmax.f32 %v1686, 0.0
        %v1719 = vmax.f32 %v1687, 0.0
        %v1720 = vmax.f32 %v1688, 0.0
        %v1721 = vmax.f32 %v1689, 0.0
        %v1722 = vmax.f32 %v1690, 0.0
        %v1723 = vmax.f32 %v1691, 0.0
        %v1724 = vmax.f32 %v1692, 0.0
        %v1725 = vmax.f32 %v1693, 0.0
        %v1726 = vmax.f32 %v1694, 0.0
        %v1727 = vmax.f32 %v1695, 0.0
        %v1728 = vmax.f32 %v1696, 0.0
        %v1729 = vmax.f32 %v1697, 0.0
        %v1730 = vmax.f32 %v1698, 0.0
        %v1731 = vmax.f32 %v1699, 0.0
        %v1732 = vmax.f32 %v1700, 0.0
        %v1733 = vmax.f32 %v1701, 0.0
        %v1734 = vmax.f32 %v1702, 0.0
        %v1735 = vmax.f32 %v1703, 0.0
        %v1736 = vmax.f32 %v1704, 0.0
        %v1737 = vmax.f32 %v1705, 0.0
        %v1738 = vmax.f32 %v1706, 0.0
        %v1739 = vmax.f32 %v1707, 0.0
        %v1740 = vmax.f32 %v1708, 0.0
        %v1741 = vmax.f32 %v1709, 0.0
        %v1742 = vmax.f32 %v1710, 0.0
        %v1743 = vmax.f32 %v1711, 0.0
        %v1744 = vmax.f32 %v1712, 0.0
        %v1745 = vmax.f32 %v1713, 0.0
        %v1746 = vmax.f32 %v1714, 0.0
        %v1747 = vmax.f32 %v1715, 0.0
        %v1748 = vld [vmem:[%s3] sm:$0xf]
        %v1749 = vpack.c.bf16 %v1732, %v1716
        %v1750 = vpack.c.bf16 %v1733, %v1717
        %v1751 = vpack.c.bf16 %v1734, %v1718
        %v1752 = vpack.c.bf16 %v1735, %v1719
        %v1753 = vpack.c.bf16 %v1736, %v1720
        %v1754 = vpack.c.bf16 %v1737, %v1721
        %v1755 = vpack.c.bf16 %v1738, %v1722
        %v1756 = vpack.c.bf16 %v1739, %v1723
        %v1757 = vpack.c.bf16 %v1740, %v1724
        %v1758 = vpack.c.bf16 %v1741, %v1725
        %v1759 = vpack.c.bf16 %v1742, %v1726
        %v1760 = vpack.c.bf16 %v1743, %v1727
        %v1761 = vpack.c.bf16 %v1744, %v1728
        %v1762 = vpack.c.bf16 %v1745, %v1729
        %v1763 = vpack.c.bf16 %v1746, %v1730
        %v1764 = vpack.c.bf16 %v1747, %v1731
        %v1765 = vld [vmem:[%s4] sm:$0xff]
        %1767 = vset.pattern.permute.xlu0 0
        %1768 = vperm.xlu0 %1767, %v1765
        %v1769 = vpop.permute.xlu0 %1768
        %vm1771 = vcmask 130048
        %v1773 = vsel %vm1771, %v1748, 0
        %1775 = vmatprep.subr.bf16.mxu0 0
        %1776 = vmatpush1.bf16.msra.mxu0 0
        %1777 = vmatprep.subr.bf16.mxu0 0
        %1778 = vmatpush1.bf16.msra.mxu0 0
        %1779 = vmatprep.subr.bf16.mxu0 0
        %1780 = vmatpush1.bf16.msra.mxu0 0
        %1781 = vmatprep.subr.bf16.mxu0 0
        %1782 = vmatpush1.bf16.msra.mxu0 0
        %1783 = vmatprep.subr.bf16.mxu0 0
        %1784 = vmatpush1.bf16.msra.mxu0 0
        %1785 = vmatprep.subr.bf16.mxu0 0
        %1786 = vmatpush1.bf16.msra.mxu0 0
        %1787 = vmatprep.subr.bf16.mxu0 0
        %1788 = vmatpush1.bf16.msra.mxu0 0
        %1789 = vmatprep.subr.bf16.mxu0 %v1750
        %1790 = vmatpush1.bf16.msra.mxu0 %v1749
        %1791 = vmatprep.subr.bf16.mxu0 0
        %1792 = vmatpush2.bf16.msra.mxu0 0
        %1793 = vmatprep.subr.bf16.mxu0 0
        %1794 = vmatpush2.bf16.msra.mxu0 0
        %1795 = vmatprep.subr.bf16.mxu0 0
        %1796 = vmatpush2.bf16.msra.mxu0 0
        %1797 = vmatprep.subr.bf16.mxu0 0
        %1798 = vmatpush2.bf16.msra.mxu0 0
        %1799 = vmatprep.subr.bf16.mxu0 0
        %1800 = vmatpush2.bf16.msra.mxu0 0
        %1801 = vmatprep.subr.bf16.mxu0 0
        %1802 = vmatpush2.bf16.msra.mxu0 0
        %1803 = vmatprep.subr.bf16.mxu0 0
        %1804 = vmatpush2.bf16.msra.mxu0 0
        %1805 = vmatprep.subr.bf16.mxu0 0
        %1806 = vmatpush2.bf16.msra.mxu0 0
        %1807 = vmatprep.mubr.bf16.mxu0 0
        %1808 = vmatmul.mubr.bf16.gmra.mxu0 %v1773
        %v1809 = vpop.f32.mrf.mxu0
        %v1810 = vadd.f32 %v1769, %v1809
        %v1811 = vpop.f32.mrf.mxu0
        %v1812 = vadd.f32 %v1769, %v1811
        %v1813 = vpop.f32.mrf.mxu0
        %v1814 = vpop.f32.mrf.mxu0
        %1815 = vdwg.mxu0
        %1816 = vmatprep.subr.bf16.mxu0 0
        %1817 = vmatpush1.bf16.msra.mxu0 0
        %1818 = vmatprep.subr.bf16.mxu0 0
        %1819 = vmatpush1.bf16.msra.mxu0 0
        %1820 = vmatprep.subr.bf16.mxu0 0
        %1821 = vmatpush1.bf16.msra.mxu0 0
        %1822 = vmatprep.subr.bf16.mxu0 0
        %1823 = vmatpush1.bf16.msra.mxu0 0
        %1824 = vmatprep.subr.bf16.mxu0 0
        %1825 = vmatpush1.bf16.msra.mxu0 0
        %1826 = vmatprep.subr.bf16.mxu0 0
        %1827 = vmatpush1.bf16.msra.mxu0 0
        %1828 = vmatprep.subr.bf16.mxu0 0
        %1829 = vmatpush1.bf16.msra.mxu0 0
        %1830 = vmatprep.subr.bf16.mxu0 %v1752
        %1831 = vmatpush1.bf16.msra.mxu0 %v1751
        %1832 = vmatprep.subr.bf16.mxu0 0
        %1833 = vmatpush2.bf16.msra.mxu0 0
        %1834 = vmatprep.subr.bf16.mxu0 0
        %1835 = vmatpush2.bf16.msra.mxu0 0
        %1836 = vmatprep.subr.bf16.mxu0 0
        %1837 = vmatpush2.bf16.msra.mxu0 0
        %1838 = vmatprep.subr.bf16.mxu0 0
        %1839 = vmatpush2.bf16.msra.mxu0 0
        %1840 = vmatprep.subr.bf16.mxu0 0
        %1841 = vmatpush2.bf16.msra.mxu0 0
        %1842 = vmatprep.subr.bf16.mxu0 0
        %1843 = vmatpush2.bf16.msra.mxu0 0
        %1844 = vmatprep.subr.bf16.mxu0 0
        %1845 = vmatpush2.bf16.msra.mxu0 0
        %1846 = vmatprep.subr.bf16.mxu0 0
        %1847 = vmatpush2.bf16.msra.mxu0 0
        %1848 = vmatprep.mubr.bf16.mxu0 0
        %1849 = vmatmul.mubr.bf16.gmra.mxu0 %v1773
        %v1850 = vpop.f32.mrf.mxu0
        %v1851 = vadd.f32 %v1769, %v1850
        %v1852 = vpop.f32.mrf.mxu0
        %v1853 = vadd.f32 %v1769, %v1852
        %v1854 = vpop.f32.mrf.mxu0
        %v1855 = vpop.f32.mrf.mxu0
        %1856 = vdwg.mxu0
        %1857 = vmatprep.subr.bf16.mxu0 0
        %1858 = vmatpush1.bf16.msra.mxu0 0
        %1859 = vmatprep.subr.bf16.mxu0 0
        %1860 = vmatpush1.bf16.msra.mxu0 0
        %1861 = vmatprep.subr.bf16.mxu0 0
        %1862 = vmatpush1.bf16.msra.mxu0 0
        %1863 = vmatprep.subr.bf16.mxu0 0
        %1864 = vmatpush1.bf16.msra.mxu0 0
        %1865 = vmatprep.subr.bf16.mxu0 0
        %1866 = vmatpush1.bf16.msra.mxu0 0
        %1867 = vmatprep.subr.bf16.mxu0 0
        %1868 = vmatpush1.bf16.msra.mxu0 0
        %1869 = vmatprep.subr.bf16.mxu0 0
        %1870 = vmatpush1.bf16.msra.mxu0 0
        %1871 = vmatprep.subr.bf16.mxu0 %v1754
        %1872 = vmatpush1.bf16.msra.mxu0 %v1753
        %1873 = vmatprep.subr.bf16.mxu0 0
        %1874 = vmatpush2.bf16.msra.mxu0 0
        %1875 = vmatprep.subr.bf16.mxu0 0
        %1876 = vmatpush2.bf16.msra.mxu0 0
        %1877 = vmatprep.subr.bf16.mxu0 0
        %1878 = vmatpush2.bf16.msra.mxu0 0
        %1879 = vmatprep.subr.bf16.mxu0 0
        %1880 = vmatpush2.bf16.msra.mxu0 0
        %1881 = vmatprep.subr.bf16.mxu0 0
        %1882 = vmatpush2.bf16.msra.mxu0 0
        %1883 = vmatprep.subr.bf16.mxu0 0
        %1884 = vmatpush2.bf16.msra.mxu0 0
        %1885 = vmatprep.subr.bf16.mxu0 0
        %1886 = vmatpush2.bf16.msra.mxu0 0
        %1887 = vmatprep.subr.bf16.mxu0 0
        %1888 = vmatpush2.bf16.msra.mxu0 0
        %1889 = vmatprep.mubr.bf16.mxu0 0
        %1890 = vmatmul.mubr.bf16.gmra.mxu0 %v1773
        %v1891 = vpop.f32.mrf.mxu0
        %v1892 = vadd.f32 %v1769, %v1891
        %v1893 = vpop.f32.mrf.mxu0
        %v1894 = vadd.f32 %v1769, %v1893
        %v1895 = vpop.f32.mrf.mxu0
        %v1896 = vpop.f32.mrf.mxu0
        %1897 = vdwg.mxu0
        %1898 = vmatprep.subr.bf16.mxu0 0
        %1899 = vmatpush1.bf16.msra.mxu0 0
        %1900 = vmatprep.subr.bf16.mxu0 0
        %1901 = vmatpush1.bf16.msra.mxu0 0
        %1902 = vmatprep.subr.bf16.mxu0 0
        %1903 = vmatpush1.bf16.msra.mxu0 0
        %1904 = vmatprep.subr.bf16.mxu0 0
        %1905 = vmatpush1.bf16.msra.mxu0 0
        %1906 = vmatprep.subr.bf16.mxu0 0
        %1907 = vmatpush1.bf16.msra.mxu0 0
        %1908 = vmatprep.subr.bf16.mxu0 0
        %1909 = vmatpush1.bf16.msra.mxu0 0
        %1910 = vmatprep.subr.bf16.mxu0 0
        %1911 = vmatpush1.bf16.msra.mxu0 0
        %1912 = vmatprep.subr.bf16.mxu0 %v1756
        %1913 = vmatpush1.bf16.msra.mxu0 %v1755
        %1914 = vmatprep.subr.bf16.mxu0 0
        %1915 = vmatpush2.bf16.msra.mxu0 0
        %1916 = vmatprep.subr.bf16.mxu0 0
        %1917 = vmatpush2.bf16.msra.mxu0 0
        %1918 = vmatprep.subr.bf16.mxu0 0
        %1919 = vmatpush2.bf16.msra.mxu0 0
        %1920 = vmatprep.subr.bf16.mxu0 0
        %1921 = vmatpush2.bf16.msra.mxu0 0
        %1922 = vmatprep.subr.bf16.mxu0 0
        %1923 = vmatpush2.bf16.msra.mxu0 0
        %1924 = vmatprep.subr.bf16.mxu0 0
        %1925 = vmatpush2.bf16.msra.mxu0 0
        %1926 = vmatprep.subr.bf16.mxu0 0
        %1927 = vmatpush2.bf16.msra.mxu0 0
        %1928 = vmatprep.subr.bf16.mxu0 0
        %1929 = vmatpush2.bf16.msra.mxu0 0
        %1930 = vmatprep.mubr.bf16.mxu0 0
        %1931 = vmatmul.mubr.bf16.gmra.mxu0 %v1773
        %v1932 = vpop.f32.mrf.mxu0
        %v1933 = vadd.f32 %v1769, %v1932
        %v1934 = vpop.f32.mrf.mxu0
        %v1935 = vadd.f32 %v1769, %v1934
        %v1936 = vpop.f32.mrf.mxu0
        %v1937 = vpop.f32.mrf.mxu0
        %1938 = vdwg.mxu0
        %1939 = vmatprep.subr.bf16.mxu0 0
        %1940 = vmatpush1.bf16.msra.mxu0 0
        %1941 = vmatprep.subr.bf16.mxu0 0
        %1942 = vmatpush1.bf16.msra.mxu0 0
        %1943 = vmatprep.subr.bf16.mxu0 0
        %1944 = vmatpush1.bf16.msra.mxu0 0
        %1945 = vmatprep.subr.bf16.mxu0 0
        %1946 = vmatpush1.bf16.msra.mxu0 0
        %1947 = vmatprep.subr.bf16.mxu0 0
        %1948 = vmatpush1.bf16.msra.mxu0 0
        %1949 = vmatprep.subr.bf16.mxu0 0
        %1950 = vmatpush1.bf16.msra.mxu0 0
        %1951 = vmatprep.subr.bf16.mxu0 0
        %1952 = vmatpush1.bf16.msra.mxu0 0
        %1953 = vmatprep.subr.bf16.mxu0 %v1758
        %1954 = vmatpush1.bf16.msra.mxu0 %v1757
        %1955 = vmatprep.subr.bf16.mxu0 0
        %1956 = vmatpush2.bf16.msra.mxu0 0
        %1957 = vmatprep.subr.bf16.mxu0 0
        %1958 = vmatpush2.bf16.msra.mxu0 0
        %1959 = vmatprep.subr.bf16.mxu0 0
        %1960 = vmatpush2.bf16.msra.mxu0 0
        %1961 = vmatprep.subr.bf16.mxu0 0
        %1962 = vmatpush2.bf16.msra.mxu0 0
        %1963 = vmatprep.subr.bf16.mxu0 0
        %1964 = vmatpush2.bf16.msra.mxu0 0
        %1965 = vmatprep.subr.bf16.mxu0 0
        %1966 = vmatpush2.bf16.msra.mxu0 0
        %1967 = vmatprep.subr.bf16.mxu0 0
        %1968 = vmatpush2.bf16.msra.mxu0 0
        %1969 = vmatprep.subr.bf16.mxu0 0
        %1970 = vmatpush2.bf16.msra.mxu0 0
        %1971 = vmatprep.mubr.bf16.mxu0 0
        %1972 = vmatmul.mubr.bf16.gmra.mxu0 %v1773
        %v1973 = vpop.f32.mrf.mxu0
        %v1974 = vadd.f32 %v1769, %v1973
        %v1975 = vpop.f32.mrf.mxu0
        %v1976 = vadd.f32 %v1769, %v1975
        %v1977 = vpop.f32.mrf.mxu0
        %v1978 = vpop.f32.mrf.mxu0
        %1979 = vdwg.mxu0
        %1980 = vmatprep.subr.bf16.mxu0 0
        %1981 = vmatpush1.bf16.msra.mxu0 0
        %1982 = vmatprep.subr.bf16.mxu0 0
        %1983 = vmatpush1.bf16.msra.mxu0 0
        %1984 = vmatprep.subr.bf16.mxu0 0
        %1985 = vmatpush1.bf16.msra.mxu0 0
        %1986 = vmatprep.subr.bf16.mxu0 0
        %1987 = vmatpush1.bf16.msra.mxu0 0
        %1988 = vmatprep.subr.bf16.mxu0 0
        %1989 = vmatpush1.bf16.msra.mxu0 0
        %1990 = vmatprep.subr.bf16.mxu0 0
        %1991 = vmatpush1.bf16.msra.mxu0 0
        %1992 = vmatprep.subr.bf16.mxu0 0
        %1993 = vmatpush1.bf16.msra.mxu0 0
        %1994 = vmatprep.subr.bf16.mxu0 %v1760
        %1995 = vmatpush1.bf16.msra.mxu0 %v1759
        %1996 = vmatprep.subr.bf16.mxu0 0
        %1997 = vmatpush2.bf16.msra.mxu0 0
        %1998 = vmatprep.subr.bf16.mxu0 0
        %1999 = vmatpush2.bf16.msra.mxu0 0
        %2000 = vmatprep.subr.bf16.mxu0 0
        %2001 = vmatpush2.bf16.msra.mxu0 0
        %2002 = vmatprep.subr.bf16.mxu0 0
        %2003 = vmatpush2.bf16.msra.mxu0 0
        %2004 = vmatprep.subr.bf16.mxu0 0
        %2005 = vmatpush2.bf16.msra.mxu0 0
        %2006 = vmatprep.subr.bf16.mxu0 0
        %2007 = vmatpush2.bf16.msra.mxu0 0
        %2008 = vmatprep.subr.bf16.mxu0 0
        %2009 = vmatpush2.bf16.msra.mxu0 0
        %2010 = vmatprep.subr.bf16.mxu0 0
        %2011 = vmatpush2.bf16.msra.mxu0 0
        %2012 = vmatprep.mubr.bf16.mxu0 0
        %2013 = vmatmul.mubr.bf16.gmra.mxu0 %v1773
        %v2014 = vpop.f32.mrf.mxu0
        %v2015 = vadd.f32 %v1769, %v2014
        %v2016 = vpop.f32.mrf.mxu0
        %v2017 = vadd.f32 %v1769, %v2016
        %v2018 = vpop.f32.mrf.mxu0
        %v2019 = vpop.f32.mrf.mxu0
        %2020 = vdwg.mxu0
        %2021 = vmatprep.subr.bf16.mxu0 0
        %2022 = vmatpush1.bf16.msra.mxu0 0
        %2023 = vmatprep.subr.bf16.mxu0 0
        %2024 = vmatpush1.bf16.msra.mxu0 0
        %2025 = vmatprep.subr.bf16.mxu0 0
        %2026 = vmatpush1.bf16.msra.mxu0 0
        %2027 = vmatprep.subr.bf16.mxu0 0
        %2028 = vmatpush1.bf16.msra.mxu0 0
        %2029 = vmatprep.subr.bf16.mxu0 0
        %2030 = vmatpush1.bf16.msra.mxu0 0
        %2031 = vmatprep.subr.bf16.mxu0 0
        %2032 = vmatpush1.bf16.msra.mxu0 0
        %2033 = vmatprep.subr.bf16.mxu0 0
        %2034 = vmatpush1.bf16.msra.mxu0 0
        %2035 = vmatprep.subr.bf16.mxu0 %v1762
        %2036 = vmatpush1.bf16.msra.mxu0 %v1761
        %2037 = vmatprep.subr.bf16.mxu0 0
        %2038 = vmatpush2.bf16.msra.mxu0 0
        %2039 = vmatprep.subr.bf16.mxu0 0
        %2040 = vmatpush2.bf16.msra.mxu0 0
        %2041 = vmatprep.subr.bf16.mxu0 0
        %2042 = vmatpush2.bf16.msra.mxu0 0
        %2043 = vmatprep.subr.bf16.mxu0 0
        %2044 = vmatpush2.bf16.msra.mxu0 0
        %2045 = vmatprep.subr.bf16.mxu0 0
        %2046 = vmatpush2.bf16.msra.mxu0 0
        %2047 = vmatprep.subr.bf16.mxu0 0
        %2048 = vmatpush2.bf16.msra.mxu0 0
        %2049 = vmatprep.subr.bf16.mxu0 0
        %2050 = vmatpush2.bf16.msra.mxu0 0
        %2051 = vmatprep.subr.bf16.mxu0 0
        %2052 = vmatpush2.bf16.msra.mxu0 0
        %2053 = vmatprep.mubr.bf16.mxu0 0
        %2054 = vmatmul.mubr.bf16.gmra.mxu0 %v1773
        %v2055 = vpop.f32.mrf.mxu0
        %v2056 = vadd.f32 %v1769, %v2055
        %v2057 = vpop.f32.mrf.mxu0
        %v2058 = vadd.f32 %v1769, %v2057
        %v2059 = vpop.f32.mrf.mxu0
        %v2060 = vpop.f32.mrf.mxu0
        %2061 = vdwg.mxu0
        %2062 = vmatprep.subr.bf16.mxu0 0
        %2063 = vmatpush1.bf16.msra.mxu0 0
        %2064 = vmatprep.subr.bf16.mxu0 0
        %2065 = vmatpush1.bf16.msra.mxu0 0
        %2066 = vmatprep.subr.bf16.mxu0 0
        %2067 = vmatpush1.bf16.msra.mxu0 0
        %2068 = vmatprep.subr.bf16.mxu0 0
        %2069 = vmatpush1.bf16.msra.mxu0 0
        %2070 = vmatprep.subr.bf16.mxu0 0
        %2071 = vmatpush1.bf16.msra.mxu0 0
        %2072 = vmatprep.subr.bf16.mxu0 0
        %2073 = vmatpush1.bf16.msra.mxu0 0
        %2074 = vmatprep.subr.bf16.mxu0 0
        %2075 = vmatpush1.bf16.msra.mxu0 0
        %2076 = vmatprep.subr.bf16.mxu0 %v1764
        %2077 = vmatpush1.bf16.msra.mxu0 %v1763
        %2078 = vmatprep.subr.bf16.mxu0 0
        %2079 = vmatpush2.bf16.msra.mxu0 0
        %2080 = vmatprep.subr.bf16.mxu0 0
        %2081 = vmatpush2.bf16.msra.mxu0 0
        %2082 = vmatprep.subr.bf16.mxu0 0
        %2083 = vmatpush2.bf16.msra.mxu0 0
        %2084 = vmatprep.subr.bf16.mxu0 0
        %2085 = vmatpush2.bf16.msra.mxu0 0
        %2086 = vmatprep.subr.bf16.mxu0 0
        %2087 = vmatpush2.bf16.msra.mxu0 0
        %2088 = vmatprep.subr.bf16.mxu0 0
        %2089 = vmatpush2.bf16.msra.mxu0 0
        %2090 = vmatprep.subr.bf16.mxu0 0
        %2091 = vmatpush2.bf16.msra.mxu0 0
        %2092 = vmatprep.subr.bf16.mxu0 0
        %2093 = vmatpush2.bf16.msra.mxu0 0
        %2094 = vmatprep.mubr.bf16.mxu0 0
        %2095 = vmatmul.mubr.bf16.gmra.mxu0 %v1773
        %v2096 = vpop.f32.mrf.mxu0
        %v2097 = vadd.f32 %v1769, %v2096
        %v2098 = vpop.f32.mrf.mxu0
        %v2099 = vadd.f32 %v1769, %v2098
        %v2100 = vpop.f32.mrf.mxu0
        %v2101 = vpop.f32.mrf.mxu0
        %2102 = vdwg.mxu0
        %2103 = vst [vmem:[%s242] sm:$0xff] %v1810
        %2104 = vst [vmem:[%s242 + $0x8] sm:$0xff] %v1812
        %2105 = vst [vmem:[%s242 + $0x10] sm:$0xff] %v1851
        %2106 = vst [vmem:[%s242 + $0x18] sm:$0xff] %v1853
        %2107 = vst [vmem:[%s242 + $0x20] sm:$0xff] %v1892
        %2108 = vst [vmem:[%s242 + $0x28] sm:$0xff] %v1894
        %2109 = vst [vmem:[%s242 + $0x30] sm:$0xff] %v1933
        %2110 = vst [vmem:[%s242 + $0x38] sm:$0xff] %v1935
        %2111 = vst [vmem:[%s242 + $0x40] sm:$0xff] %v1974
        %2112 = vst [vmem:[%s242 + $0x48] sm:$0xff] %v1976
        %2113 = vst [vmem:[%s242 + $0x50] sm:$0xff] %v2015
        %2114 = vst [vmem:[%s242 + $0x58] sm:$0xff] %v2017
        %2115 = vst [vmem:[%s242 + $0x60] sm:$0xff] %v2056
        %2116 = vst [vmem:[%s242 + $0x68] sm:$0xff] %v2058
        %2117 = vst [vmem:[%s242 + $0x70] sm:$0xff] %v2097
        %2118 = vst [vmem:[%s242 + $0x78] sm:$0xff] %v2099
        %s2119 = sand.u32 %s140, 1
        %s2120 = scalar_lea.sflag [#allocation4], %s2119
        %s2121 = sand.u32 %s140, 1
        %s2122 = smul.addr %s2121, 128
        %s2123 = scalar_lea.vmem [#allocation5], %s2122
        // Predicated region
        $region45: #{tpu_custom_call.1} parent=39 // pred_check
          %p2124 = pneg %p150
        $region46: #{tpu_custom_call.1} parent=39 // pred_check_branch
          %2126 = sbr.rel (%p2124) target = $region48
        $region47: #{tpu_custom_call.1} parent=39 // pred_region
          %s2127 = smul.u32 16, %s22
          %s2129 = ssub.s32 2048, 2048
          %2130 = vsyncadd %s2120, %s2129
          %s2131 = smul.addr %s2127, 128
          %s2132 = scalar_lea.hbm %s5, %s2131
          %s2134 = sshll.u32 %s2123, 4
          %s2135 = int_to_ptr.vmem [resolvable:$true] %s2134
          %2137 = dma.vmem_to_hbm [thread:$0]  %s2135, 2048, %s2132, %s2120
        $region48: #{tpu_custom_call.1} parent=39 // pred_fallthru
          _
      $region40: #{tpu_custom_call.1} parent=5 // pred_fallthru
        _
      %p2138 = scmp.le.s32.totalorder 2, %s17
      // Predicated region
      $region49: #{tpu_custom_call.1} parent=5 // pred_check
        %p2139 = pneg %p2138
      $region50: #{tpu_custom_call.1} parent=5 // pred_check_branch
        %2141 = sbr.rel (%p2139) target = $region52
      $region51: #{tpu_custom_call.1} parent=5 // pred_region
        %s2142 = ssub.s32 %s17, 2
        // Predicated region
        $region53: #{tpu_custom_call.1} parent=51 // pred_check
          %p2143 = pneg %p156
        $region54: #{tpu_custom_call.1} parent=51 // pred_check_branch
          %2145 = sbr.rel (%p2143) target = $region56
        $region55: #{tpu_custom_call.1} parent=51 // pred_region
          %s2146 = sand.u32 %s141, 1
          %s2147 = scalar_lea.sflag [#allocation4], %s2146
          %s2148 = sand.u32 %s141, 1
          %s2149 = smul.addr %s2148, 128
          %s2150 = scalar_lea.vmem [#allocation5], %s2149
          %2151 = dma.done %s2147, 2048
        $region56: #{tpu_custom_call.1} parent=51 // pred_fallthru
          _
      $region52: #{tpu_custom_call.1} parent=5 // pred_fallthru
        _
    $region6: #{tpu_custom_call.1} parent=1 // loop_footer
      %s21 = sadd.s32 1, %s17
    $region7: #{tpu_custom_call.1} parent=1 // loop_footer_branch
      %16 = sbr.rel target = $region3
    $region8: #{tpu_custom_call.1} parent=1 // loop_exit
      _
    %2152 = vsyncpa [#allocation3], 1
    %s2153 = scalar_lea.sflag [#allocation3], 1
    %2154 = vsyncpa %s2153, 1
    %2155 = vsyncpa [#allocation4], 1
    %s2156 = scalar_lea.sflag [#allocation4], 1
    %2157 = vsyncpa %s2156, 1

</llo_original>
